<compile_context>
chip_gen: v7x
topology: tpu7x:2x2x1
jax: 0.10.0
libtpu: 0.0.40
codegen_flags: <defaults>
</compile_context>

<pallas_src>
import math
import functools

import jax
import jax.numpy as jnp
from jax.experimental import pallas as pl
from jax.experimental.pallas import tpu as pltpu

BF16 = jnp.bfloat16


# ----------------------------------------------------------------------------
# in-kernel math helpers (all f32 on the VPU/EUP path)
# ----------------------------------------------------------------------------
def _gelu(x):
    # tanh-approximation GELU (EUP tanh instead of a long VALU polynomial).
    c = 0.7978845608028654  # sqrt(2/pi)
    return 0.5 * x * (1.0 + jnp.tanh(c * (x + 0.044715 * x * x * x)))


def _layernorm(x, w, b, eps=1e-5):
    mu = jnp.mean(x, axis=-1, keepdims=True)
    xc = x - mu
    var = jnp.mean(xc * xc, axis=-1, keepdims=True)
    return xc * jax.lax.rsqrt(var + eps) * w + b


# ----------------------------------------------------------------------------
# tiling / VMEM helpers
# ----------------------------------------------------------------------------
@functools.lru_cache(maxsize=None)
def _vmem_limit():
    cap = 128 * 1024 * 1024
    try:
        cap = int(pltpu.get_tpu_info().vmem_capacity_bytes)
    except Exception:
        pass
    # ~75% of physical VMEM, clamped: v7x (64 MiB) -> 48 MiB, v5e/v6e -> 96 MiB.
    return int(min(max(cap * 3 // 4, 32 * 1024 * 1024), 96 * 1024 * 1024))


def _pick_batch_tile(B, L, E, vmem_bytes, target_rows=256):
    """Largest batch tile that (a) divides B exactly, (b) keeps >= 2 grid steps
    so v7x's two TensorCores can split the parallel axis, (c) gives bt*L around
    `target_rows` MXU rows, and (d) keeps the per-step activation footprint well
    inside the VMEM budget."""
    cap = max(1, B // 2)                                   # grid length >= 2
    want = max(1, target_rows // max(L, 1))                # fill the MXU M dim
    fit = max(1, int(vmem_bytes * 0.4) // max(1, 12 * L * E * 4))
    lim = max(1, min(cap, want, fit, B))
    best = 1
    for bt in range(1, lim + 1):
        if B % bt == 0:
            best = bt
    return best


def _single_buffered(block_shape, index_map):
    """BlockSpec for a grid-invariant operand: the block never changes, so the
    second pipeline buffer is pure VMEM waste -> request single buffering when
    this JAX exposes pipeline_mode / pl.Buffered, else fall back to default."""
    buffered = getattr(pl, "Buffered", None)
    if buffered is not None:
        try:
            return pl.BlockSpec(block_shape, index_map, pipeline_mode=buffered(1))
        except Exception:
            pass
    return pl.BlockSpec(block_shape, index_map)


# ----------------------------------------------------------------------------
# Pallas kernels
# ----------------------------------------------------------------------------
def _encoder_kernel(q_ref, x_ref, bias_ref,
                    wq_ref, bq_ref, wkv_ref, bkv_ref, wo_ref, bo_ref,
                    ln1w_ref, ln1b_ref,
                    w1_ref, b1_ref, w2_ref, b2_ref,
                    ln2w_ref, ln2b_ref,
                    out_ref, attn_ref, *, num_heads):
    """All `Blocks` layers for one batch tile.

    Grid is (batch_tiles, num_en).  The running activation is carried in
    out_ref (same output block index for every layer => it stays resident in
    VMEM across the layer loop and is written back to HBM once per tile)."""
    bt, L, E = q_ref.shape
    H = num_heads
    D = E // H
    rows = bt * L

    # layer 0: seed the carried activation with the embedding input.
    @pl.when(pl.program_id(1) == 0)
    def _():
        out_ref[...] = x_ref[...]

    q2 = q_ref[...].reshape(rows, E)       # query stream (qshftemb), f32
    kv2 = out_ref[...].reshape(rows, E)    # running activation (k = v), f32

    # fused projections (1/sqrt(D) already folded into wq/bq at init time).
    qp = jnp.dot(q2.astype(BF16), wq_ref[0],
                 preferred_element_type=jnp.float32) + bq_ref[0]            # (rows, E)
    kvp = jnp.dot(kv2.astype(BF16), wkv_ref[0],
                  preferred_element_type=jnp.float32) + bkv_ref[0]          # (rows, 2E)

    qp3 = qp.reshape(bt, L, E).astype(BF16)
    kp3 = kvp[:, :E].reshape(bt, L, E).astype(BF16)
    vp3 = kvp[:, E:].reshape(bt, L, E).astype(BF16)
    bias = bias_ref[...][None]             # (1, L, L) broadcast over the tile

    # Per-head scores/softmax (H is small and static).  Each head's context is
    # written straight into its lane slice of the VMEM scratch, so no list of
    # head outputs stays live and no concatenate is needed.
    for h in range(H):
        sl = slice(h * D, (h + 1) * D)
        s = jnp.einsum('bld,bmd->blm', qp3[:, :, sl], kp3[:, :, sl],
                       preferred_element_type=jnp.float32) + bias           # (bt, L, L)
        s = s - jnp.max(s, axis=-1, keepdims=True)
        e = jnp.exp(s)
        p = e * pl.reciprocal(jnp.sum(e, axis=-1, keepdims=True), approx=True)
        o = jnp.einsum('blm,bmd->bld', p.astype(BF16), vp3[:, :, sl],
                       preferred_element_type=jnp.float32)                  # (bt, L, D)
        attn_ref[:, sl] = o.reshape(rows, D)

    # single K=E output projection over the concatenated heads.
    attn = jnp.dot(attn_ref[...].astype(BF16), wo_ref[0],
                   preferred_element_type=jnp.float32) + bo_ref[0]

    # residual on the query stream (as in the reference) + LayerNorm (f32).
    x1 = _layernorm(q2 + attn, ln1w_ref[0], ln1b_ref[0])

    # transformer_FFN: Linear -> ReLU -> (Dropout) -> Linear
    f1 = jnp.maximum(jnp.dot(x1.astype(BF16), w1_ref[0],
                             preferred_element_type=jnp.float32) + b1_ref[0], 0.0)
    f2 = jnp.dot(f1.astype(BF16), w2_ref[0],
                 preferred_element_type=jnp.float32) + b2_ref[0]
    y = _layernorm(x1 + f2, ln2w_ref[0], ln2b_ref[0])
    out_ref[...] = y.reshape(bt, L, E)


def _denoise_pred_kernel(xn_ref, h_ref, xs_ref, tp_ref,
                         dw1x_ref, dw1h_ref, db1_ref, dw2_ref, db2_ref,
                         pw_ref, pb_ref, out_ref):
    """denoise_model MLP + per-token SSE vs x_start, fused with the sigmoid
    prediction head.  Output is one lane-dense (bt, 2, Lpad) slab:
    row 0 = sigmoid(pred(xemb)), row 1 = sum_E (x_start - predicted_x)^2."""
    bt, L, E = xn_ref.shape
    lanes = out_ref.shape[-1]                       # Lpad = round_up(L, 128)
    rows = bt * L

    xn2 = xn_ref[...].reshape(rows, E).astype(BF16)
    h2 = h_ref[...].reshape(rows, E).astype(BF16)

    # Linear over concat([x_noisy, h, t_emb], -1) without materializing the
    # concat: the first-layer weight is pre-split per input chunk on the host
    # and the (tiny) t-chunk is precomputed in glue and shipped as tp_ref.
    z = (jnp.dot(xn2, dw1x_ref[...], preferred_element_type=jnp.float32)
         + jnp.dot(h2, dw1h_ref[...], preferred_element_type=jnp.float32)
         + db1_ref[...])                                                     # (rows, 2E)
    z = z.reshape(bt, L, 2 * E) + tp_ref[...]                                # + t chunk
    z = _gelu(z).reshape(rows, 2 * E)
    pred = jnp.dot(z.astype(BF16), dw2_ref[...],
                   preferred_element_type=jnp.float32) + db2_ref[...]        # (rows, E)

    xs = xs_ref[...]                                                          # (bt, L, E)
    diff = xs.reshape(rows, E) - pred
    sse = jnp.sum(diff * diff, axis=-1).reshape(bt, L)                        # (bt, L)

    # pred head: Linear(E, 1) + EXACT sigmoid, as a VPU reduction.
    logits = jnp.sum(xs * pw_ref[...][None, :, :], axis=-1) + pb_ref[...]     # (bt, L)
    prob = 1.0 / (1.0 + jnp.exp(-logits))

    if lanes != L:   # pad the last dim to a multiple of 128 -> unmasked stores
        pad = jnp.zeros((bt, lanes - L), jnp.float32)
        prob = jnp.concatenate([prob, pad], axis=-1)
        sse = jnp.concatenate([sse, pad], axis=-1)
    out_ref[:, 0, :] = prob
    out_ref[:, 1, :] = sse


# ----------------------------------------------------------------------------
# pallas_call wrappers
# ----------------------------------------------------------------------------
def run_encoder(qshft, xemb, bias, enc, num_heads):
    B, L, E = xemb.shape
    num_en = enc['wq'].shape[0]
    vmem = _vmem_limit()
    bt = _pick_batch_tile(B, L, E, vmem)
    nb = B // bt

    act_spec = pl.BlockSpec((bt, L, E), lambda b, l: (b, 0, 0))
    bias_spec = _single_buffered((L, L), lambda b, l: (0, 0))

    def w_spec(arr):  # stacked per-layer weights: walk the layer grid axis
        return pl.BlockSpec((1,) + arr.shape[1:], lambda b, l: (l, 0, 0))

    weights = (enc['wq'], enc['bq'], enc['wkv'], enc['bkv'], enc['wo'], enc['bo'],
               enc['ln1_w'], enc['ln1_b'],
               enc['ffn_w1'], enc['ffn_b1'], enc['ffn_w2'], enc['ffn_b2'],
               enc['ln2_w'], enc['ln2_b'])
    in_specs = [act_spec, act_spec, bias_spec] + [w_spec(w) for w in weights]

    flops = num_en * B * (12 * L * E * E + 4 * L * L * E)
    w_bytes = sum(int(w.size) * w.dtype.itemsize for w in weights) + 4 * L * L
    act_bytes = 4 * 3 * B * L * E
    return pl.pallas_call(
        functools.partial(_encoder_kernel, num_heads=num_heads),
        grid=(nb, num_en),
        out_shape=jax.ShapeDtypeStruct((B, L, E), jnp.float32),
        in_specs=in_specs,
        out_specs=act_spec,
        scratch_shapes=[pltpu.VMEM((bt * L, E), jnp.float32)],
        compiler_params=pltpu.CompilerParams(
            dimension_semantics=("parallel", "arbitrary"),
            vmem_limit_bytes=vmem),
        cost_estimate=pl.CostEstimate(
            flops=int(flops),
            transcendentals=int(num_en * B * num_heads * L * L),
            bytes_accessed=int(w_bytes + act_bytes)),
    )(qshft, xemb, bias, *weights)


def run_denoise_pred(x_noisy, h, x_start, t_part, params):
    B, L, E = x_noisy.shape
    Lp = ((L + 127) // 128) * 128
    vmem = _vmem_limit()
    bt = _pick_batch_tile(B, L, E, vmem)
    nb = B // bt

    act_spec = pl.BlockSpec((bt, L, E), lambda b: (b, 0, 0))
    tp_spec = pl.BlockSpec((bt, 1, 2 * E), lambda b: (b, 0, 0))
    out_spec = pl.BlockSpec((bt, 2, Lp), lambda b: (b, 0, 0))

    weights = (params['den_w1x'], params['den_w1h'], params['den_b1'],
               params['den_w2'], params['den_b2'],
               params['pred_w'], params['pred_b'])
    in_specs = [act_spec, act_spec, act_spec, tp_spec] + \
               [_single_buffered(w.shape, lambda b, _nd=w.ndim: (0,) * _nd)
                for w in weights]

    flops = 12 * B * L * E * E + 2 * B * L * E
    w_bytes = sum(int(w.size) * w.dtype.itemsize for w in weights)
    out = pl.pallas_call(
        _denoise_pred_kernel,
        grid=(nb,),
        out_shape=jax.ShapeDtypeStruct((B, 2, Lp), jnp.float32),
        in_specs=in_specs,
        out_specs=out_spec,
        compiler_params=pltpu.CompilerParams(
            dimension_semantics=("parallel",),
            vmem_limit_bytes=vmem),
        cost_estimate=pl.CostEstimate(
            flops=int(flops),
            transcendentals=int(3 * B * L * E),
            bytes_accessed=int(w_bytes + 4 * (3 * B * L * E + 2 * B * E + 2 * B * Lp))),
    )(x_noisy, h, x_start, t_part, *weights)
    return out[:, 0, :L], out[:, 1, :L]


# ----------------------------------------------------------------------------
# plain-JAX glue: params, diffusion schedule, gumbel attention mask, forward
# ----------------------------------------------------------------------------
def init_params(key, num_c, seq_len, emb_size, num_heads, num_en):
    E = emb_size
    D = E // num_heads
    scale = 1.0 / math.sqrt(D)                 # softmax scale folded into wq/bq
    keys = iter(jax.random.split(key, 64))

    def nrm(shape, s=0.05, dtype=jnp.float32):
        return (s * jax.random.normal(next(keys), shape)).astype(dtype)

    params = dict(
        interaction_emb=nrm((num_c * 2, E)),
        exercise_emb=nrm((num_c, E)),
        position_emb=nrm((seq_len, E)),
        init_alphas=(0.001 * jax.random.normal(next(keys), (seq_len, 2))).astype(jnp.float32),
        # time MLP (weights pre-transposed to [in, out], bf16 MXU operands)
        time_w1=nrm((E, 2 * E), dtype=BF16), time_b1=jnp.zeros((1, 2 * E), jnp.float32),
        time_w2=nrm((2 * E, E), dtype=BF16), time_b2=jnp.zeros((1, E), jnp.float32),
        # denoise MLP first layer pre-split per input chunk [x_noisy | h | t_emb]
        den_w1x=nrm((E, 2 * E), dtype=BF16), den_w1h=nrm((E, 2 * E), dtype=BF16),
        den_w1t=nrm((E, 2 * E), dtype=BF16), den_b1=jnp.zeros((1, 2 * E), jnp.float32),
        den_w2=nrm((2 * E, E), dtype=BF16), den_b2=jnp.zeros((1, E), jnp.float32),
        uncond_emb=nrm((1, E)),   # TODO(synk): only used by qtest=True sampling path (not implemented)
        pred_w=nrm((1, E)), pred_b=jnp.zeros((1, 1), jnp.float32),
    )
    # stacked encoder weights, [layer, in, out]; 1/sqrt(D) folded into wq/bq.
    params['enc'] = dict(
        wq=(nrm((num_en, E, E)) * scale).astype(BF16),
        bq=(jnp.zeros((num_en, 1, E), jnp.float32) * scale),
        wkv=nrm((num_en, E, 2 * E), dtype=BF16),
        bkv=jnp.zeros((num_en, 1, 2 * E), jnp.float32),
        wo=nrm((num_en, E, E), dtype=BF16),
        bo=jnp.zeros((num_en, 1, E), jnp.float32),
        ln1_w=jnp.ones((num_en, 1, E), jnp.float32),
        ln1_b=jnp.zeros((num_en, 1, E), jnp.float32),
        ffn_w1=nrm((num_en, E, E), dtype=BF16),
        ffn_b1=jnp.zeros((num_en, 1, E), jnp.float32),
        ffn_w2=nrm((num_en, E, E), dtype=BF16),
        ffn_b2=jnp.zeros((num_en, 1, E), jnp.float32),
        ln2_w=jnp.ones((num_en, 1, E), jnp.float32),
        ln2_b=jnp.zeros((num_en, 1, E), jnp.float32),
    )
    return params


def exp_beta_schedule(timesteps, beta_min=0.1, beta_max=10.0):
    x = jnp.linspace(1.0, 2.0 * timesteps + 1.0, timesteps)
    return 1.0 - jnp.exp(-beta_min / timesteps
                         - x * 0.5 * (beta_max - beta_min) / (timesteps * timesteps))


def diffusion_consts(timesteps):
    betas = exp_beta_schedule(timesteps).astype(jnp.float32)
    alphas = 1.0 - betas
    acp = jnp.cumprod(alphas, axis=0)
    return jnp.sqrt(acp), jnp.sqrt(1.0 - acp)


def build_attention_bias(init_alphas, key, seq_len):
    # Gumbel-softmax (hard, straight-through) over init_alphas; the reference's
    # expand/triu/rot90/shift construction reduces to dam[i, j] = v[|i - j|],
    # identical for every head, so a single (L, L) additive bias is emitted.
    eps = 1e-5
    g = -jnp.log(jax.random.exponential(key, init_alphas.shape) + eps)
    y_soft = jax.nn.softmax((init_alphas + g) / 1.0, axis=-1)
    idx = jnp.argmax(y_soft, axis=-1)
    v = jax.nn.one_hot(idx, 2, dtype=jnp.float32)[:, 0]          # (L,), in {0, 1}
    ii = jnp.arange(seq_len)
    dam2d = v[jnp.abs(ii[:, None] - ii[None, :])]
    causal = ii[None, :] > ii[:, None]
    # TODO(synk): reference does `bool_causal_mask.masked_fill(dam == 0, -inf)`,
    # which is dtype-ambiguous in torch; intended semantics implemented: additive
    # -inf where the position is in the causal future OR dam == 0 (-1e30 keeps
    # fully-masked softmax rows NaN-free, unlike torch's -inf).
    return jnp.where(jnp.logical_or(causal, dam2d == 0.0), -1e30, 0.0).astype(jnp.float32)


def desakt_forward(params, q, r, qry, key, *, num_c, seq_len, emb_size,
                   num_heads, timesteps, lamb, sqrt_acp, sqrt_1macp):
    B, L = q.shape
    E = emb_size
    k_dam, k_t, k_noise = jax.random.split(key, 3)

    # base_emb (embedding gathers are glue)
    x = q + num_c * r
    qshftemb = jnp.take(params['exercise_emb'], qry, axis=0)
    xemb = jnp.take(params['interaction_emb'], x, axis=0) + params['position_emb'][None, :L, :]

    bias = build_attention_bias(params['init_alphas'], k_dam, seq_len)   # (L, L)

    # all encoder layers fused into one pallas_call
    xemb = run_encoder(qshftemb, xemb, bias, params['enc'], num_heads)

    # diffusion p_losses (training branch, qtest=False)
    t = jax.random.randint(k_t, (B,), 0, timesteps)
    noise = jax.random.normal(k_noise, xemb.shape, dtype=jnp.float32)
    x_noisy = (sqrt_acp[t][:, None, None] * xemb
               + sqrt_1macp[t][:, None, None] * noise)

    # time MLP + t-chunk of the denoise first layer: (B, E)-sized work, hoisted
    # out of the gridded kernel into plain JAX.
    half = E // 2
    freq = jnp.exp(jnp.arange(half) * (-math.log(10000.0) / (half - 1)))
    ang = t.astype(jnp.float32)[:, None] * freq[None, :]
    sin_emb = jnp.concatenate([jnp.sin(ang), jnp.cos(ang)], axis=-1)      # (B, E)
    t1 = _gelu(sin_emb @ params['time_w1'].astype(jnp.float32) + params['time_b1'])
    temb = t1 @ params['time_w2'].astype(jnp.float32) + params['time_b2']  # (B, E)
    t_part = (temb @ params['den_w1t'].astype(jnp.float32)).reshape(B, 1, 2 * E)

    p, sse = run_denoise_pred(x_noisy, qshftemb, xemb, t_part, params)
    diff_loss = jnp.sum(sse) / (B * L * E)        # MSE(x_start, predicted_x)

    mask_l1 = jnp.sum(jnp.abs(params['init_alphas']))
    return p, mask_l1 + lamb * diff_loss


# ----------------------------------------------------------------------------
if __name__ == "__main__":
    # small config consistent with the module
    num_c, seq_len, emb_size, num_heads = 10, 8, 32, 4
    num_en, timesteps, lamb = 2, 16, 1e-4
    B = 2

    root = jax.random.PRNGKey(0)
    k_param, k_q, k_r, k_qry, k_fwd = jax.random.split(root, 5)

    params = init_params(k_param, num_c, seq_len, emb_size, num_heads, num_en)
    sqrt_acp, sqrt_1macp = diffusion_consts(timesteps)

    q = jax.random.randint(k_q, (B, seq_len), 0, num_c)
    r = jax.random.randint(k_r, (B, seq_len), 0, 2)
    qry = jax.random.randint(k_qry, (B, seq_len), 0, num_c)

    p, loss = desakt_forward(
        params, q, r, qry, k_fwd,
        num_c=num_c, seq_len=seq_len, emb_size=emb_size, num_heads=num_heads,
        timesteps=timesteps, lamb=lamb, sqrt_acp=sqrt_acp, sqrt_1macp=sqrt_1macp)

    jax.block_until_ready((p, loss))
    assert p.shape == (B, seq_len)
    assert bool(jnp.all(jnp.isfinite(p))) and bool(jnp.isfinite(loss))
    print("KERNEL_OK")
</pallas_src>

<mosaic_0001>
module attributes {stable_mosaic.version = 11 : i64} {
  func.func @_encoder_kernel(%arg0: i32, %arg1: i32, %arg2: memref<1x8x32xf32, #tpu.memory_space<vmem>>, %arg3: memref<1x8x32xf32, #tpu.memory_space<vmem>>, %arg4: memref<8x8xf32, #tpu.memory_space<vmem>>, %arg5: memref<1x32x32xbf16, #tpu.memory_space<vmem>>, %arg6: memref<1x1x32xf32, #tpu.memory_space<vmem>>, %arg7: memref<1x32x64xbf16, #tpu.memory_space<vmem>>, %arg8: memref<1x1x64xf32, #tpu.memory_space<vmem>>, %arg9: memref<1x32x32xbf16, #tpu.memory_space<vmem>>, %arg10: memref<1x1x32xf32, #tpu.memory_space<vmem>>, %arg11: memref<1x1x32xf32, #tpu.memory_space<vmem>>, %arg12: memref<1x1x32xf32, #tpu.memory_space<vmem>>, %arg13: memref<1x32x32xbf16, #tpu.memory_space<vmem>>, %arg14: memref<1x1x32xf32, #tpu.memory_space<vmem>>, %arg15: memref<1x32x32xbf16, #tpu.memory_space<vmem>>, %arg16: memref<1x1x32xf32, #tpu.memory_space<vmem>>, %arg17: memref<1x1x32xf32, #tpu.memory_space<vmem>>, %arg18: memref<1x1x32xf32, #tpu.memory_space<vmem>>, %arg19: memref<1x8x32xf32, #tpu.memory_space<vmem>>, %arg20: memref<8x32xf32, #tpu.memory_space<vmem>>) attributes {dimension_semantics = [#tpu.dimension_semantics<parallel>, #tpu.dimension_semantics<arbitrary>], iteration_bounds = array<i64: 2, 2>, scalar_prefetch = 0 : i64, scratch_operands = 1 : i64, tpu.core_type = #tpu.core_type<tc>, window_params = [{transform_indices = @transform_0, window_bounds = array<i64: 1, 8, 32>}, {transform_indices = @transform_1, window_bounds = array<i64: 1, 8, 32>}, {pipeline_mode = #tpu.pipeline_mode<synchronous>, transform_indices = @transform_2, window_bounds = array<i64: 8, 8>}, {transform_indices = @transform_3, window_bounds = array<i64: 1, 32, 32>}, {transform_indices = @transform_4, window_bounds = array<i64: 1, 1, 32>}, {transform_indices = @transform_5, window_bounds = array<i64: 1, 32, 64>}, {transform_indices = @transform_6, window_bounds = array<i64: 1, 1, 64>}, {transform_indices = @transform_7, window_bounds = array<i64: 1, 32, 32>}, {transform_indices = @transform_8, window_bounds = array<i64: 1, 1, 32>}, {transform_indices = @transform_9, window_bounds = array<i64: 1, 1, 32>}, {transform_indices = @transform_10, window_bounds = array<i64: 1, 1, 32>}, {transform_indices = @transform_11, window_bounds = array<i64: 1, 32, 32>}, {transform_indices = @transform_12, window_bounds = array<i64: 1, 1, 32>}, {transform_indices = @transform_13, window_bounds = array<i64: 1, 32, 32>}, {transform_indices = @transform_14, window_bounds = array<i64: 1, 1, 32>}, {transform_indices = @transform_15, window_bounds = array<i64: 1, 1, 32>}, {transform_indices = @transform_16, window_bounds = array<i64: 1, 1, 32>}, {transform_indices = @transform_17, window_bounds = array<i64: 1, 8, 32>}]} {
    %c0_i32 = arith.constant 0 : i32
    %0 = arith.cmpi eq, %arg1, %c0_i32 : i32
    %1 = arith.extui %0 : i1 to i32
    %c0_i32_0 = arith.constant 0 : i32
    %2 = arith.cmpi ne, %1, %c0_i32_0 : i32
    scf.if %2 {
      %c0_91 = arith.constant 0 : index
      %c0_92 = arith.constant 0 : index
      %c0_93 = arith.constant 0 : index
      %188 = vector.load %arg3[%c0_91, %c0_92, %c0_93] : memref<1x8x32xf32, #tpu.memory_space<vmem>>, vector<1x8x32xf32>
      %c0_94 = arith.constant 0 : index
      %c0_95 = arith.constant 0 : index
      %c0_96 = arith.constant 0 : index
      %189 = vector.load %arg19[%c0_94, %c0_95, %c0_96] : memref<1x8x32xf32, #tpu.memory_space<vmem>>, vector<1x8x32xf32>
      tpu.vector_store %arg19[%c0_94, %c0_95, %c0_96], %188 {strides = array<i32>} : memref<1x8x32xf32, #tpu.memory_space<vmem>>, vector<1x8x32xf32>,
    } else {
    }
    %c0 = arith.constant 0 : index
    %c0_1 = arith.constant 0 : index
    %c0_2 = arith.constant 0 : index
    %3 = vector.load %arg2[%c0, %c0_1, %c0_2] : memref<1x8x32xf32, #tpu.memory_space<vmem>>, vector<1x8x32xf32>
    %4 = vector.shape_cast %3 : vector<1x8x32xf32> to vector<8x32xf32>
    %c0_3 = arith.constant 0 : index
    %c0_4 = arith.constant 0 : index
    %c0_5 = arith.constant 0 : index
    %5 = vector.load %arg19[%c0_3, %c0_4, %c0_5] : memref<1x8x32xf32, #tpu.memory_space<vmem>>, vector<1x8x32xf32>
    %6 = vector.shape_cast %5 : vector<1x8x32xf32> to vector<8x32xf32>
    %7 = arith.truncf %4 : vector<8x32xf32> to vector<8x32xbf16>
    %c0_6 = arith.constant 0 : index
    %c0_7 = arith.constant 0 : index
    %c0_8 = arith.constant 0 : index
    %8 = vector.load %arg5[%c0_6, %c0_7, %c0_8] : memref<1x32x32xbf16, #tpu.memory_space<vmem>>, vector<1x32x32xbf16>
    %9 = vector.shape_cast %8 : vector<1x32x32xbf16> to vector<32x32xbf16>
    %cst = arith.constant dense<0.000000e+00> : vector<8x32xf32>
    %10 = tpu.matmul %7, %9, %cst {dimension_numbers = #tpu.dot_dimension_numbers<[1], [0], [0], [1], [0, 0, 1, 1], [], []>} : vector<8x32xbf16>, vector<32x32xbf16>, vector<8x32xf32> -> vector<8x32xf32>
    %c0_9 = arith.constant 0 : index
    %c0_10 = arith.constant 0 : index
    %c0_11 = arith.constant 0 : index
    %11 = vector.load %arg6[%c0_9, %c0_10, %c0_11] : memref<1x1x32xf32, #tpu.memory_space<vmem>>, vector<1x1x32xf32>
    %12 = vector.shape_cast %11 : vector<1x1x32xf32> to vector<1x32xf32>
    %13 = vector.broadcast %12 : vector<1x32xf32> to vector<8x32xf32>
    %14 = arith.addf %10, %13 : vector<8x32xf32>
    %15 = arith.truncf %6 : vector<8x32xf32> to vector<8x32xbf16>
    %c0_12 = arith.constant 0 : index
    %c0_13 = arith.constant 0 : index
    %c0_14 = arith.constant 0 : index
    %16 = vector.load %arg7[%c0_12, %c0_13, %c0_14] : memref<1x32x64xbf16, #tpu.memory_space<vmem>>, vector<1x32x64xbf16>
    %17 = vector.shape_cast %16 : vector<1x32x64xbf16> to vector<32x64xbf16>
    %cst_15 = arith.constant dense<0.000000e+00> : vector<8x64xf32>
    %18 = tpu.matmul %15, %17, %cst_15 {dimension_numbers = #tpu.dot_dimension_numbers<[1], [0], [0], [1], [0, 0, 1, 1], [], []>} : vector<8x32xbf16>, vector<32x64xbf16>, vector<8x64xf32> -> vector<8x64xf32>
    %c0_16 = arith.constant 0 : index
    %c0_17 = arith.constant 0 : index
    %c0_18 = arith.constant 0 : index
    %19 = vector.load %arg8[%c0_16, %c0_17, %c0_18] : memref<1x1x64xf32, #tpu.memory_space<vmem>>, vector<1x1x64xf32>
    %20 = vector.shape_cast %19 : vector<1x1x64xf32> to vector<1x64xf32>
    %21 = vector.broadcast %20 : vector<1x64xf32> to vector<8x64xf32>
    %22 = arith.addf %18, %21 : vector<8x64xf32>
    %23 = vector.shape_cast %14 : vector<8x32xf32> to vector<1x8x32xf32>
    %24 = arith.truncf %23 : vector<1x8x32xf32> to vector<1x8x32xbf16>
    %25 = vector.extract_strided_slice %22 {offsets = [0, 0], sizes = [8, 32], strides = [1, 1]} : vector<8x64xf32> to vector<8x32xf32>
    %26 = vector.shape_cast %25 : vector<8x32xf32> to vector<1x8x32xf32>
    %27 = arith.truncf %26 : vector<1x8x32xf32> to vector<1x8x32xbf16>
    %28 = vector.extract_strided_slice %22 {offsets = [0, 32], sizes = [8, 32], strides = [1, 1]} : vector<8x64xf32> to vector<8x32xf32>
    %29 = vector.shape_cast %28 : vector<8x32xf32> to vector<1x8x32xf32>
    %30 = arith.truncf %29 : vector<1x8x32xf32> to vector<1x8x32xbf16>
    %c0_19 = arith.constant 0 : index
    %c0_20 = arith.constant 0 : index
    %31 = vector.load %arg4[%c0_19, %c0_20] : memref<8x8xf32, #tpu.memory_space<vmem>>, vector<8x8xf32>
    %32 = vector.shape_cast %31 : vector<8x8xf32> to vector<1x8x8xf32>
    %33 = vector.extract_strided_slice %24 {offsets = [0, 0, 0], sizes = [1, 8, 8], strides = [1, 1, 1]} : vector<1x8x32xbf16> to vector<1x8x8xbf16>
    %34 = vector.extract_strided_slice %27 {offsets = [0, 0, 0], sizes = [1, 8, 8], strides = [1, 1, 1]} : vector<1x8x32xbf16> to vector<1x8x8xbf16>
    "tpu.trace_start"() <{level = 10 : i32, message = "bld,bmd->blm"}> : () -> ()
    %cst_21 = arith.constant dense<0.000000e+00> : vector<1x8x8xf32>
    %35 = tpu.matmul %33, %34, %cst_21 {dimension_numbers = #tpu.dot_dimension_numbers<[2], [2], [1], [1], [0, 0, 0, 1, 1, 1], [0], [0]>} : vector<1x8x8xbf16>, vector<1x8x8xbf16>, vector<1x8x8xf32> -> vector<1x8x8xf32>
    "tpu.trace_stop"() : () -> ()
    %36 = arith.addf %35, %32 : vector<1x8x8xf32>
    %cst_22 = arith.constant dense<0xFF800000> : vector<1x8xf32>
    %37 = vector.multi_reduction <maximumf>, %36, %cst_22 [2] : vector<1x8x8xf32> to vector<1x8xf32>
    %38 = vector.shape_cast %37 : vector<1x8xf32> to vector<1x8x1xf32>
    %39 = vector.broadcast %38 : vector<1x8x1xf32> to vector<1x8x8xf32>
    %40 = arith.subf %36, %39 : vector<1x8x8xf32>
    %41 = math.exp %40 : vector<1x8x8xf32>
    %cst_23 = arith.constant dense<0.000000e+00> : vector<1x8xf32>
    %42 = vector.multi_reduction <add>, %41, %cst_23 [2] : vector<1x8x8xf32> to vector<1x8xf32>
    %43 = vector.shape_cast %42 : vector<1x8xf32> to vector<1x8x1xf32>
    %44 = tpu.reciprocal %43 {approx = true} : vector<1x8x1xf32> -> vector<1x8x1xf32>
    %45 = vector.broadcast %44 : vector<1x8x1xf32> to vector<1x8x8xf32>
    %46 = arith.mulf %41, %45 : vector<1x8x8xf32>
    %47 = arith.truncf %46 : vector<1x8x8xf32> to vector<1x8x8xbf16>
    %48 = vector.extract_strided_slice %30 {offsets = [0, 0, 0], sizes = [1, 8, 8], strides = [1, 1, 1]} : vector<1x8x32xbf16> to vector<1x8x8xbf16>
    "tpu.trace_start"() <{level = 10 : i32, message = "blm,bmd->bld"}> : () -> ()
    %cst_24 = arith.constant dense<0.000000e+00> : vector<1x8x8xf32>
    %49 = tpu.matmul %47, %48, %cst_24 {dimension_numbers = #tpu.dot_dimension_numbers<[2], [1], [1], [2], [0, 0, 0, 1, 1, 2], [0], [0]>} : vector<1x8x8xbf16>, vector<1x8x8xbf16>, vector<1x8x8xf32> -> vector<1x8x8xf32>
    "tpu.trace_stop"() : () -> ()
    %50 = vector.shape_cast %49 : vector<1x8x8xf32> to vector<8x8xf32>
    %c0_25 = arith.constant 0 : index
    %c0_26 = arith.constant 0 : index
    %51 = vector.load %arg20[%c0_25, %c0_26] : memref<8x32xf32, #tpu.memory_space<vmem>>, vector<8x8xf32>
    tpu.vector_store %arg20[%c0_25, %c0_26], %50 {strides = array<i32>} : memref<8x32xf32, #tpu.memory_space<vmem>>, vector<8x8xf32>,
    %52 = vector.extract_strided_slice %24 {offsets = [0, 0, 8], sizes = [1, 8, 8], strides = [1, 1, 1]} : vector<1x8x32xbf16> to vector<1x8x8xbf16>
    %53 = vector.extract_strided_slice %27 {offsets = [0, 0, 8], sizes = [1, 8, 8], strides = [1, 1, 1]} : vector<1x8x32xbf16> to vector<1x8x8xbf16>
    "tpu.trace_start"() <{level = 10 : i32, message = "bld,bmd->blm"}> : () -> ()
    %cst_27 = arith.constant dense<0.000000e+00> : vector<1x8x8xf32>
    %54 = tpu.matmul %52, %53, %cst_27 {dimension_numbers = #tpu.dot_dimension_numbers<[2], [2], [1], [1], [0, 0, 0, 1, 1, 1], [0], [0]>} : vector<1x8x8xbf16>, vector<1x8x8xbf16>, vector<1x8x8xf32> -> vector<1x8x8xf32>
    "tpu.trace_stop"() : () -> ()
    %55 = arith.addf %54, %32 : vector<1x8x8xf32>
    %cst_28 = arith.constant dense<0xFF800000> : vector<1x8xf32>
    %56 = vector.multi_reduction <maximumf>, %55, %cst_28 [2] : vector<1x8x8xf32> to vector<1x8xf32>
    %57 = vector.shape_cast %56 : vector<1x8xf32> to vector<1x8x1xf32>
    %58 = vector.broadcast %57 : vector<1x8x1xf32> to vector<1x8x8xf32>
    %59 = arith.subf %55, %58 : vector<1x8x8xf32>
    %60 = math.exp %59 : vector<1x8x8xf32>
    %cst_29 = arith.constant dense<0.000000e+00> : vector<1x8xf32>
    %61 = vector.multi_reduction <add>, %60, %cst_29 [2] : vector<1x8x8xf32> to vector<1x8xf32>
    %62 = vector.shape_cast %61 : vector<1x8xf32> to vector<1x8x1xf32>
    %63 = tpu.reciprocal %62 {approx = true} : vector<1x8x1xf32> -> vector<1x8x1xf32>
    %64 = vector.broadcast %63 : vector<1x8x1xf32> to vector<1x8x8xf32>
    %65 = arith.mulf %60, %64 : vector<1x8x8xf32>
    %66 = arith.truncf %65 : vector<1x8x8xf32> to vector<1x8x8xbf16>
    %67 = vector.extract_strided_slice %30 {offsets = [0, 0, 8], sizes = [1, 8, 8], strides = [1, 1, 1]} : vector<1x8x32xbf16> to vector<1x8x8xbf16>
    "tpu.trace_start"() <{level = 10 : i32, message = "blm,bmd->bld"}> : () -> ()
    %cst_30 = arith.constant dense<0.000000e+00> : vector<1x8x8xf32>
    %68 = tpu.matmul %66, %67, %cst_30 {dimension_numbers = #tpu.dot_dimension_numbers<[2], [1], [1], [2], [0, 0, 0, 1, 1, 2], [0], [0]>} : vector<1x8x8xbf16>, vector<1x8x8xbf16>, vector<1x8x8xf32> -> vector<1x8x8xf32>
    "tpu.trace_stop"() : () -> ()
    %69 = vector.shape_cast %68 : vector<1x8x8xf32> to vector<8x8xf32>
    %c0_31 = arith.constant 0 : index
    %c8 = arith.constant 8 : index
    %70 = vector.load %arg20[%c0_31, %c8] : memref<8x32xf32, #tpu.memory_space<vmem>>, vector<8x8xf32>
    tpu.vector_store %arg20[%c0_31, %c8], %69 {strides = array<i32>} : memref<8x32xf32, #tpu.memory_space<vmem>>, vector<8x8xf32>,
    %71 = vector.extract_strided_slice %24 {offsets = [0, 0, 16], sizes = [1, 8, 8], strides = [1, 1, 1]} : vector<1x8x32xbf16> to vector<1x8x8xbf16>
    %72 = vector.extract_strided_slice %27 {offsets = [0, 0, 16], sizes = [1, 8, 8], strides = [1, 1, 1]} : vector<1x8x32xbf16> to vector<1x8x8xbf16>
    "tpu.trace_start"() <{level = 10 : i32, message = "bld,bmd->blm"}> : () -> ()
    %cst_32 = arith.constant dense<0.000000e+00> : vector<1x8x8xf32>
    %73 = tpu.matmul %71, %72, %cst_32 {dimension_numbers = #tpu.dot_dimension_numbers<[2], [2], [1], [1], [0, 0, 0, 1, 1, 1], [0], [0]>} : vector<1x8x8xbf16>, vector<1x8x8xbf16>, vector<1x8x8xf32> -> vector<1x8x8xf32>
    "tpu.trace_stop"() : () -> ()
    %74 = arith.addf %73, %32 : vector<1x8x8xf32>
    %cst_33 = arith.constant dense<0xFF800000> : vector<1x8xf32>
    %75 = vector.multi_reduction <maximumf>, %74, %cst_33 [2] : vector<1x8x8xf32> to vector<1x8xf32>
    %76 = vector.shape_cast %75 : vector<1x8xf32> to vector<1x8x1xf32>
    %77 = vector.broadcast %76 : vector<1x8x1xf32> to vector<1x8x8xf32>
    %78 = arith.subf %74, %77 : vector<1x8x8xf32>
    %79 = math.exp %78 : vector<1x8x8xf32>
    %cst_34 = arith.constant dense<0.000000e+00> : vector<1x8xf32>
    %80 = vector.multi_reduction <add>, %79, %cst_34 [2] : vector<1x8x8xf32> to vector<1x8xf32>
    %81 = vector.shape_cast %80 : vector<1x8xf32> to vector<1x8x1xf32>
    %82 = tpu.reciprocal %81 {approx = true} : vector<1x8x1xf32> -> vector<1x8x1xf32>
    %83 = vector.broadcast %82 : vector<1x8x1xf32> to vector<1x8x8xf32>
    %84 = arith.mulf %79, %83 : vector<1x8x8xf32>
    %85 = arith.truncf %84 : vector<1x8x8xf32> to vector<1x8x8xbf16>
    %86 = vector.extract_strided_slice %30 {offsets = [0, 0, 16], sizes = [1, 8, 8], strides = [1, 1, 1]} : vector<1x8x32xbf16> to vector<1x8x8xbf16>
    "tpu.trace_start"() <{level = 10 : i32, message = "blm,bmd->bld"}> : () -> ()
    %cst_35 = arith.constant dense<0.000000e+00> : vector<1x8x8xf32>
    %87 = tpu.matmul %85, %86, %cst_35 {dimension_numbers = #tpu.dot_dimension_numbers<[2], [1], [1], [2], [0, 0, 0, 1, 1, 2], [0], [0]>} : vector<1x8x8xbf16>, vector<1x8x8xbf16>, vector<1x8x8xf32> -> vector<1x8x8xf32>
    "tpu.trace_stop"() : () -> ()
    %88 = vector.shape_cast %87 : vector<1x8x8xf32> to vector<8x8xf32>
    %c0_36 = arith.constant 0 : index
    %c16 = arith.constant 16 : index
    %89 = vector.load %arg20[%c0_36, %c16] : memref<8x32xf32, #tpu.memory_space<vmem>>, vector<8x8xf32>
    tpu.vector_store %arg20[%c0_36, %c16], %88 {strides = array<i32>} : memref<8x32xf32, #tpu.memory_space<vmem>>, vector<8x8xf32>,
    %90 = vector.extract_strided_slice %24 {offsets = [0, 0, 24], sizes = [1, 8, 8], strides = [1, 1, 1]} : vector<1x8x32xbf16> to vector<1x8x8xbf16>
    %91 = vector.extract_strided_slice %27 {offsets = [0, 0, 24], sizes = [1, 8, 8], strides = [1, 1, 1]} : vector<1x8x32xbf16> to vector<1x8x8xbf16>
    "tpu.trace_start"() <{level = 10 : i32, message = "bld,bmd->blm"}> : () -> ()
    %cst_37 = arith.constant dense<0.000000e+00> : vector<1x8x8xf32>
    %92 = tpu.matmul %90, %91, %cst_37 {dimension_numbers = #tpu.dot_dimension_numbers<[2], [2], [1], [1], [0, 0, 0, 1, 1, 1], [0], [0]>} : vector<1x8x8xbf16>, vector<1x8x8xbf16>, vector<1x8x8xf32> -> vector<1x8x8xf32>
    "tpu.trace_stop"() : () -> ()
    %93 = arith.addf %92, %32 : vector<1x8x8xf32>
    %cst_38 = arith.constant dense<0xFF800000> : vector<1x8xf32>
    %94 = vector.multi_reduction <maximumf>, %93, %cst_38 [2] : vector<1x8x8xf32> to vector<1x8xf32>
    %95 = vector.shape_cast %94 : vector<1x8xf32> to vector<1x8x1xf32>
    %96 = vector.broadcast %95 : vector<1x8x1xf32> to vector<1x8x8xf32>
    %97 = arith.subf %93, %96 : vector<1x8x8xf32>
    %98 = math.exp %97 : vector<1x8x8xf32>
    %cst_39 = arith.constant dense<0.000000e+00> : vector<1x8xf32>
    %99 = vector.multi_reduction <add>, %98, %cst_39 [2] : vector<1x8x8xf32> to vector<1x8xf32>
    %100 = vector.shape_cast %99 : vector<1x8xf32> to vector<1x8x1xf32>
    %101 = tpu.reciprocal %100 {approx = true} : vector<1x8x1xf32> -> vector<1x8x1xf32>
    %102 = vector.broadcast %101 : vector<1x8x1xf32> to vector<1x8x8xf32>
    %103 = arith.mulf %98, %102 : vector<1x8x8xf32>
    %104 = arith.truncf %103 : vector<1x8x8xf32> to vector<1x8x8xbf16>
    %105 = vector.extract_strided_slice %30 {offsets = [0, 0, 24], sizes = [1, 8, 8], strides = [1, 1, 1]} : vector<1x8x32xbf16> to vector<1x8x8xbf16>
    "tpu.trace_start"() <{level = 10 : i32, message = "blm,bmd->bld"}> : () -> ()
    %cst_40 = arith.constant dense<0.000000e+00> : vector<1x8x8xf32>
    %106 = tpu.matmul %104, %105, %cst_40 {dimension_numbers = #tpu.dot_dimension_numbers<[2], [1], [1], [2], [0, 0, 0, 1, 1, 2], [0], [0]>} : vector<1x8x8xbf16>, vector<1x8x8xbf16>, vector<1x8x8xf32> -> vector<1x8x8xf32>
    "tpu.trace_stop"() : () -> ()
    %107 = vector.shape_cast %106 : vector<1x8x8xf32> to vector<8x8xf32>
    %c0_41 = arith.constant 0 : index
    %c24 = arith.constant 24 : index
    %108 = vector.load %arg20[%c0_41, %c24] : memref<8x32xf32, #tpu.memory_space<vmem>>, vector<8x8xf32>
    tpu.vector_store %arg20[%c0_41, %c24], %107 {strides = array<i32>} : memref<8x32xf32, #tpu.memory_space<vmem>>, vector<8x8xf32>,
    %c0_42 = arith.constant 0 : index
    %c0_43 = arith.constant 0 : index
    %109 = vector.load %arg20[%c0_42, %c0_43] : memref<8x32xf32, #tpu.memory_space<vmem>>, vector<8x32xf32>
    %110 = arith.truncf %109 : vector<8x32xf32> to vector<8x32xbf16>
    %c0_44 = arith.constant 0 : index
    %c0_45 = arith.constant 0 : index
    %c0_46 = arith.constant 0 : index
    %111 = vector.load %arg9[%c0_44, %c0_45, %c0_46] : memref<1x32x32xbf16, #tpu.memory_space<vmem>>, vector<1x32x32xbf16>
    %112 = vector.shape_cast %111 : vector<1x32x32xbf16> to vector<32x32xbf16>
    %cst_47 = arith.constant dense<0.000000e+00> : vector<8x32xf32>
    %113 = tpu.matmul %110, %112, %cst_47 {dimension_numbers = #tpu.dot_dimension_numbers<[1], [0], [0], [1], [0, 0, 1, 1], [], []>} : vector<8x32xbf16>, vector<32x32xbf16>, vector<8x32xf32> -> vector<8x32xf32>
    %c0_48 = arith.constant 0 : index
    %c0_49 = arith.constant 0 : index
    %c0_50 = arith.constant 0 : index
    %114 = vector.load %arg10[%c0_48, %c0_49, %c0_50] : memref<1x1x32xf32, #tpu.memory_space<vmem>>, vector<1x1x32xf32>
    %115 = vector.shape_cast %114 : vector<1x1x32xf32> to vector<1x32xf32>
    %116 = vector.broadcast %115 : vector<1x32xf32> to vector<8x32xf32>
    %117 = arith.addf %113, %116 : vector<8x32xf32>
    %118 = arith.addf %4, %117 : vector<8x32xf32>
    %c0_51 = arith.constant 0 : index
    %c0_52 = arith.constant 0 : index
    %c0_53 = arith.constant 0 : index
    %119 = vector.load %arg11[%c0_51, %c0_52, %c0_53] : memref<1x1x32xf32, #tpu.memory_space<vmem>>, vector<1x1x32xf32>
    %120 = vector.shape_cast %119 : vector<1x1x32xf32> to vector<1x32xf32>
    %c0_54 = arith.constant 0 : index
    %c0_55 = arith.constant 0 : index
    %c0_56 = arith.constant 0 : index
    %121 = vector.load %arg12[%c0_54, %c0_55, %c0_56] : memref<1x1x32xf32, #tpu.memory_space<vmem>>, vector<1x1x32xf32>
    %122 = vector.shape_cast %121 : vector<1x1x32xf32> to vector<1x32xf32>
    %cst_57 = arith.constant dense<0.000000e+00> : vector<8xf32>
    %123 = vector.multi_reduction <add>, %118, %cst_57 [1] : vector<8x32xf32> to vector<8xf32>
    %124 = vector.shape_cast %123 : vector<8xf32> to vector<8x1xf32>
    %cst_58 = arith.constant 3.200000e+01 : f32
    %125 = vector.broadcast %cst_58 : f32 to vector<8x1xf32>
    %126 = arith.divf %124, %125 : vector<8x1xf32>
    %127 = vector.broadcast %126 : vector<8x1xf32> to vector<8x32xf32>
    %128 = arith.subf %118, %127 : vector<8x32xf32>
    %129 = arith.mulf %128, %128 : vector<8x32xf32>
    %cst_59 = arith.constant dense<0.000000e+00> : vector<8xf32>
    %130 = vector.multi_reduction <add>, %129, %cst_59 [1] : vector<8x32xf32> to vector<8xf32>
    %131 = vector.shape_cast %130 : vector<8xf32> to vector<8x1xf32>
    %cst_60 = arith.constant 3.200000e+01 : f32
    %132 = vector.broadcast %cst_60 : f32 to vector<8x1xf32>
    %133 = arith.divf %131, %132 : vector<8x1xf32>
    %cst_61 = arith.constant 9.99999974E-6 : f32
    %134 = vector.broadcast %cst_61 : f32 to vector<8x1xf32>
    %135 = arith.addf %133, %134 : vector<8x1xf32>
    %136 = math.rsqrt %135 : vector<8x1xf32>
    %137 = vector.broadcast %136 : vector<8x1xf32> to vector<8x32xf32>
    %138 = arith.mulf %128, %137 : vector<8x32xf32>
    %139 = vector.broadcast %120 : vector<1x32xf32> to vector<8x32xf32>
    %140 = arith.mulf %138, %139 : vector<8x32xf32>
    %141 = vector.broadcast %122 : vector<1x32xf32> to vector<8x32xf32>
    %142 = arith.addf %140, %141 : vector<8x32xf32>
    %143 = arith.truncf %142 : vector<8x32xf32> to vector<8x32xbf16>
    %c0_62 = arith.constant 0 : index
    %c0_63 = arith.constant 0 : index
    %c0_64 = arith.constant 0 : index
    %144 = vector.load %arg13[%c0_62, %c0_63, %c0_64] : memref<1x32x32xbf16, #tpu.memory_space<vmem>>, vector<1x32x32xbf16>
    %145 = vector.shape_cast %144 : vector<1x32x32xbf16> to vector<32x32xbf16>
    %cst_65 = arith.constant dense<0.000000e+00> : vector<8x32xf32>
    %146 = tpu.matmul %143, %145, %cst_65 {dimension_numbers = #tpu.dot_dimension_numbers<[1], [0], [0], [1], [0, 0, 1, 1], [], []>} : vector<8x32xbf16>, vector<32x32xbf16>, vector<8x32xf32> -> vector<8x32xf32>
    %c0_66 = arith.constant 0 : index
    %c0_67 = arith.constant 0 : index
    %c0_68 = arith.constant 0 : index
    %147 = vector.load %arg14[%c0_66, %c0_67, %c0_68] : memref<1x1x32xf32, #tpu.memory_space<vmem>>, vector<1x1x32xf32>
    %148 = vector.shape_cast %147 : vector<1x1x32xf32> to vector<1x32xf32>
    %149 = vector.broadcast %148 : vector<1x32xf32> to vector<8x32xf32>
    %150 = arith.addf %146, %149 : vector<8x32xf32>
    %cst_69 = arith.constant 0.000000e+00 : f32
    %151 = vector.broadcast %cst_69 : f32 to vector<8x32xf32>
    %152 = arith.maximumf %150, %151 : vector<8x32xf32>
    %153 = arith.truncf %152 : vector<8x32xf32> to vector<8x32xbf16>
    %c0_70 = arith.constant 0 : index
    %c0_71 = arith.constant 0 : index
    %c0_72 = arith.constant 0 : index
    %154 = vector.load %arg15[%c0_70, %c0_71, %c0_72] : memref<1x32x32xbf16, #tpu.memory_space<vmem>>, vector<1x32x32xbf16>
    %155 = vector.shape_cast %154 : vector<1x32x32xbf16> to vector<32x32xbf16>
    %cst_73 = arith.constant dense<0.000000e+00> : vector<8x32xf32>
    %156 = tpu.matmul %153, %155, %cst_73 {dimension_numbers = #tpu.dot_dimension_numbers<[1], [0], [0], [1], [0, 0, 1, 1], [], []>} : vector<8x32xbf16>, vector<32x32xbf16>, vector<8x32xf32> -> vector<8x32xf32>
    %c0_74 = arith.constant 0 : index
    %c0_75 = arith.constant 0 : index
    %c0_76 = arith.constant 0 : index
    %157 = vector.load %arg16[%c0_74, %c0_75, %c0_76] : memref<1x1x32xf32, #tpu.memory_space<vmem>>, vector<1x1x32xf32>
    %158 = vector.shape_cast %157 : vector<1x1x32xf32> to vector<1x32xf32>
    %159 = vector.broadcast %158 : vector<1x32xf32> to vector<8x32xf32>
    %160 = arith.addf %156, %159 : vector<8x32xf32>
    %161 = arith.addf %142, %160 : vector<8x32xf32>
    %c0_77 = arith.constant 0 : index
    %c0_78 = arith.constant 0 : index
    %c0_79 = arith.constant 0 : index
    %162 = vector.load %arg17[%c0_77, %c0_78, %c0_79] : memref<1x1x32xf32, #tpu.memory_space<vmem>>, vector<1x1x32xf32>
    %163 = vector.shape_cast %162 : vector<1x1x32xf32> to vector<1x32xf32>
    %c0_80 = arith.constant 0 : index
    %c0_81 = arith.constant 0 : index
    %c0_82 = arith.constant 0 : index
    %164 = vector.load %arg18[%c0_80, %c0_81, %c0_82] : memref<1x1x32xf32, #tpu.memory_space<vmem>>, vector<1x1x32xf32>
    %165 = vector.shape_cast %164 : vector<1x1x32xf32> to vector<1x32xf32>
    %cst_83 = arith.constant dense<0.000000e+00> : vector<8xf32>
    %166 = vector.multi_reduction <add>, %161, %cst_83 [1] : vector<8x32xf32> to vector<8xf32>
    %167 = vector.shape_cast %166 : vector<8xf32> to vector<8x1xf32>
    %cst_84 = arith.constant 3.200000e+01 : f32
    %168 = vector.broadcast %cst_84 : f32 to vector<8x1xf32>
    %169 = arith.divf %167, %168 : vector<8x1xf32>
    %170 = vector.broadcast %169 : vector<8x1xf32> to vector<8x32xf32>
    %171 = arith.subf %161, %170 : vector<8x32xf32>
    %172 = arith.mulf %171, %171 : vector<8x32xf32>
    %cst_85 = arith.constant dense<0.000000e+00> : vector<8xf32>
    %173 = vector.multi_reduction <add>, %172, %cst_85 [1] : vector<8x32xf32> to vector<8xf32>
    %174 = vector.shape_cast %173 : vector<8xf32> to vector<8x1xf32>
    %cst_86 = arith.constant 3.200000e+01 : f32
    %175 = vector.broadcast %cst_86 : f32 to vector<8x1xf32>
    %176 = arith.divf %174, %175 : vector<8x1xf32>
    %cst_87 = arith.constant 9.99999974E-6 : f32
    %177 = vector.broadcast %cst_87 : f32 to vector<8x1xf32>
    %178 = arith.addf %176, %177 : vector<8x1xf32>
    %179 = math.rsqrt %178 : vector<8x1xf32>
    %180 = vector.broadcast %179 : vector<8x1xf32> to vector<8x32xf32>
    %181 = arith.mulf %171, %180 : vector<8x32xf32>
    %182 = vector.broadcast %163 : vector<1x32xf32> to vector<8x32xf32>
    %183 = arith.mulf %181, %182 : vector<8x32xf32>
    %184 = vector.broadcast %165 : vector<1x32xf32> to vector<8x32xf32>
    %185 = arith.addf %183, %184 : vector<8x32xf32>
    %186 = vector.shape_cast %185 : vector<8x32xf32> to vector<1x8x32xf32>
    %c0_88 = arith.constant 0 : index
    %c0_89 = arith.constant 0 : index
    %c0_90 = arith.constant 0 : index
    %187 = vector.load %arg19[%c0_88, %c0_89, %c0_90] : memref<1x8x32xf32, #tpu.memory_space<vmem>>, vector<1x8x32xf32>
    tpu.vector_store %arg19[%c0_88, %c0_89, %c0_90], %186 {strides = array<i32>} : memref<1x8x32xf32, #tpu.memory_space<vmem>>, vector<1x8x32xf32>,
    return
  }
  func.func @transform_0(%arg0: i32, %arg1: i32) -> (i32, i32, i32) {
    %c0_i32 = arith.constant 0 : i32
    %c0_i32_0 = arith.constant 0 : i32
    %c0_i32_1 = arith.constant 0 : i32
    return %arg0, %c0_i32, %c0_i32_0 : i32, i32, i32
  }
  func.func @transform_1(%arg0: i32, %arg1: i32) -> (i32, i32, i32) {
    %c0_i32 = arith.constant 0 : i32
    %c0_i32_0 = arith.constant 0 : i32
    %c0_i32_1 = arith.constant 0 : i32
    return %arg0, %c0_i32, %c0_i32_0 : i32, i32, i32
  }
  func.func @transform_2(%arg0: i32, %arg1: i32) -> (i32, i32) {
    %c0_i32 = arith.constant 0 : i32
    %c0_i32_0 = arith.constant 0 : i32
    %c0_i32_1 = arith.constant 0 : i32
    return %c0_i32, %c0_i32_0 : i32, i32
  }
  func.func @transform_3(%arg0: i32, %arg1: i32) -> (i32, i32, i32) {
    %c0_i32 = arith.constant 0 : i32
    %c0_i32_0 = arith.constant 0 : i32
    %c0_i32_1 = arith.constant 0 : i32
    return %arg1, %c0_i32, %c0_i32_0 : i32, i32, i32
  }
  func.func @transform_4(%arg0: i32, %arg1: i32) -> (i32, i32, i32) {
    %c0_i32 = arith.constant 0 : i32
    %c0_i32_0 = arith.constant 0 : i32
    %c0_i32_1 = arith.constant 0 : i32
    return %arg1, %c0_i32, %c0_i32_0 : i32, i32, i32
  }
  func.func @transform_5(%arg0: i32, %arg1: i32) -> (i32, i32, i32) {
    %c0_i32 = arith.constant 0 : i32
    %c0_i32_0 = arith.constant 0 : i32
    %c0_i32_1 = arith.constant 0 : i32
    return %arg1, %c0_i32, %c0_i32_0 : i32, i32, i32
  }
  func.func @transform_6(%arg0: i32, %arg1: i32) -> (i32, i32, i32) {
    %c0_i32 = arith.constant 0 : i32
    %c0_i32_0 = arith.constant 0 : i32
    %c0_i32_1 = arith.constant 0 : i32
    return %arg1, %c0_i32, %c0_i32_0 : i32, i32, i32
  }
  func.func @transform_7(%arg0: i32, %arg1: i32) -> (i32, i32, i32) {
    %c0_i32 = arith.constant 0 : i32
    %c0_i32_0 = arith.constant 0 : i32
    %c0_i32_1 = arith.constant 0 : i32
    return %arg1, %c0_i32, %c0_i32_0 : i32, i32, i32
  }
  func.func @transform_8(%arg0: i32, %arg1: i32) -> (i32, i32, i32) {
    %c0_i32 = arith.constant 0 : i32
    %c0_i32_0 = arith.constant 0 : i32
    %c0_i32_1 = arith.constant 0 : i32
    return %arg1, %c0_i32, %c0_i32_0 : i32, i32, i32
  }
  func.func @transform_9(%arg0: i32, %arg1: i32) -> (i32, i32, i32) {
    %c0_i32 = arith.constant 0 : i32
    %c0_i32_0 = arith.constant 0 : i32
    %c0_i32_1 = arith.constant 0 : i32
    return %arg1, %c0_i32, %c0_i32_0 : i32, i32, i32
  }
  func.func @transform_10(%arg0: i32, %arg1: i32) -> (i32, i32, i32) {
    %c0_i32 = arith.constant 0 : i32
    %c0_i32_0 = arith.constant 0 : i32
    %c0_i32_1 = arith.constant 0 : i32
    return %arg1, %c0_i32, %c0_i32_0 : i32, i32, i32
  }
  func.func @transform_11(%arg0: i32, %arg1: i32) -> (i32, i32, i32) {
    %c0_i32 = arith.constant 0 : i32
    %c0_i32_0 = arith.constant 0 : i32
    %c0_i32_1 = arith.constant 0 : i32
    return %arg1, %c0_i32, %c0_i32_0 : i32, i32, i32
  }
  func.func @transform_12(%arg0: i32, %arg1: i32) -> (i32, i32, i32) {
    %c0_i32 = arith.constant 0 : i32
    %c0_i32_0 = arith.constant 0 : i32
    %c0_i32_1 = arith.constant 0 : i32
    return %arg1, %c0_i32, %c0_i32_0 : i32, i32, i32
  }
  func.func @transform_13(%arg0: i32, %arg1: i32) -> (i32, i32, i32) {
    %c0_i32 = arith.constant 0 : i32
    %c0_i32_0 = arith.constant 0 : i32
    %c0_i32_1 = arith.constant 0 : i32
    return %arg1, %c0_i32, %c0_i32_0 : i32, i32, i32
  }
  func.func @transform_14(%arg0: i32, %arg1: i32) -> (i32, i32, i32) {
    %c0_i32 = arith.constant 0 : i32
    %c0_i32_0 = arith.constant 0 : i32
    %c0_i32_1 = arith.constant 0 : i32
    return %arg1, %c0_i32, %c0_i32_0 : i32, i32, i32
  }
  func.func @transform_15(%arg0: i32, %arg1: i32) -> (i32, i32, i32) {
    %c0_i32 = arith.constant 0 : i32
    %c0_i32_0 = arith.constant 0 : i32
    %c0_i32_1 = arith.constant 0 : i32
    return %arg1, %c0_i32, %c0_i32_0 : i32, i32, i32
  }
  func.func @transform_16(%arg0: i32, %arg1: i32) -> (i32, i32, i32) {
    %c0_i32 = arith.constant 0 : i32
    %c0_i32_0 = arith.constant 0 : i32
    %c0_i32_1 = arith.constant 0 : i32
    return %arg1, %c0_i32, %c0_i32_0 : i32, i32, i32
  }
  func.func @transform_17(%arg0: i32, %arg1: i32) -> (i32, i32, i32) {
    %c0_i32 = arith.constant 0 : i32
    %c0_i32_0 = arith.constant 0 : i32
    %c0_i32_1 = arith.constant 0 : i32
    return %arg0, %c0_i32, %c0_i32_0 : i32, i32, i32
  }
}

</mosaic_0001>

<llo_original>
// kernel: tpu_custom_call.1
$region0: #{tpu_custom_call.1}
  #allocation0 [shape = 'u32[]', space=smem, size = 0x4, offset = 0x4, fixed_abs, tag = 'smem constant byte address 0x4 - core index']
  #allocation1 [shape = 'u32[144,128]{1,0:T(1,128)}', space=vmem, size = 0x12000, scoped, tag = 'internal scratch']
  #allocation2 [shape = 'f32[8,32]{1,0:T(8,128)}', space=vmem, size = 0x1000, scoped, tag = 'scratch operand']
  %s0 = inlined_call_operand.hbm [shape: f32[2,8,32], index: 0, kind: input, shape index: {}]
  %s1 = inlined_call_operand.hbm [shape: f32[2,8,32], index: 1, kind: input, shape index: {}]
  %s2 = inlined_call_operand.hbm [shape: f32[8,8], index: 2, kind: input, shape index: {}]
  %s3 = inlined_call_operand.hbm [shape: bf16[2,32,32], index: 3, kind: input, shape index: {}]
  %s4 = inlined_call_operand.hbm [shape: f32[2,1,32], index: 4, kind: input, shape index: {}]
  %s5 = inlined_call_operand.hbm [shape: bf16[2,32,64], index: 5, kind: input, shape index: {}]
  %s6 = inlined_call_operand.hbm [shape: f32[2,1,64], index: 6, kind: input, shape index: {}]
  %s7 = inlined_call_operand.hbm [shape: bf16[2,32,32], index: 7, kind: input, shape index: {}]
  %s8 = inlined_call_operand.hbm [shape: f32[2,1,32], index: 8, kind: input, shape index: {}]
  %s9 = inlined_call_operand.hbm [shape: f32[2,1,32], index: 9, kind: input, shape index: {}]
  %s10 = inlined_call_operand.hbm [shape: f32[2,1,32], index: 10, kind: input, shape index: {}]
  %s11 = inlined_call_operand.hbm [shape: bf16[2,32,32], index: 11, kind: input, shape index: {}]
  %s12 = inlined_call_operand.hbm [shape: f32[2,1,32], index: 12, kind: input, shape index: {}]
  %s13 = inlined_call_operand.hbm [shape: bf16[2,32,32], index: 13, kind: input, shape index: {}]
  %s14 = inlined_call_operand.hbm [shape: f32[2,1,32], index: 14, kind: input, shape index: {}]
  %s15 = inlined_call_operand.hbm [shape: f32[2,1,32], index: 15, kind: input, shape index: {}]
  %s16 = inlined_call_operand.hbm [shape: f32[2,1,32], index: 16, kind: input, shape index: {}]
  %s17 = inlined_call_operand.hbm [shape: f32[2,8,32], index: 17, kind: output, shape index: {}]
  %s18 = sld [smem:[#allocation0]]
  $region173: #{tpu_custom_call.1} parent=0
    _
  %s20 = ssub.s32 1, %s18
  %s21 = scalar_select 0, %s20, %s18
  $region1: #{tpu_custom_call.1} parent=0
    #allocation3 [shape = 'u8[8192]{0}', space=vmem, size = 0x2000, scoped, tag = 'input window, operand 0']
    #allocation4 [shape = 's32[2]{0}', space=sflag, size = 0x8, scoped, tag = 'scoped memory for tpu_custom_call.1']
    #allocation5 [shape = 's32[2]{0}', space=sflag, size = 0x8, scoped, tag = 'scoped memory for tpu_custom_call.1']
    #allocation6 [shape = 'u8[8192]{0}', space=vmem, size = 0x2000, scoped, tag = 'input window, operand 1']
    #allocation7 [shape = 's32[2]{0}', space=sflag, size = 0x8, scoped, tag = 'scoped memory for tpu_custom_call.1']
    #allocation8 [shape = 'u8[4096]{0}', space=vmem, size = 0x1000, scoped, tag = 'input window, operand 2, single buffered']
    #allocation9 [shape = 'u8[16384]{0}', space=vmem, size = 0x4000, scoped, tag = 'input window, operand 3']
    #allocation10 [shape = 's32[2]{0}', space=sflag, size = 0x8, scoped, tag = 'scoped memory for tpu_custom_call.1']
    #allocation11 [shape = 'u8[1024]{0}', space=vmem, size = 0x400, scoped, tag = 'input window, operand 4']
    #allocation12 [shape = 'u8[16384]{0}', space=vmem, size = 0x4000, scoped, tag = 'input window, operand 5']
    #allocation13 [shape = 's32[2]{0}', space=sflag, size = 0x8, scoped, tag = 'scoped memory for tpu_custom_call.1']
    #allocation14 [shape = 'u8[1024]{0}', space=vmem, size = 0x400, scoped, tag = 'input window, operand 6']
    #allocation15 [shape = 'u8[16384]{0}', space=vmem, size = 0x4000, scoped, tag = 'input window, operand 7']
    #allocation16 [shape = 's32[2]{0}', space=sflag, size = 0x8, scoped, tag = 'scoped memory for tpu_custom_call.1']
    #allocation17 [shape = 'u8[1024]{0}', space=vmem, size = 0x400, scoped, tag = 'input window, operand 8']
    #allocation18 [shape = 'u8[1024]{0}', space=vmem, size = 0x400, scoped, tag = 'input window, operand 9']
    #allocation19 [shape = 's32[2]{0}', space=sflag, size = 0x8, scoped, tag = 'scoped memory for tpu_custom_call.1']
    #allocation20 [shape = 'u8[1024]{0}', space=vmem, size = 0x400, scoped, tag = 'input window, operand 10']
    #allocation21 [shape = 'u8[16384]{0}', space=vmem, size = 0x4000, scoped, tag = 'input window, operand 11']
    #allocation22 [shape = 's32[2]{0}', space=sflag, size = 0x8, scoped, tag = 'scoped memory for tpu_custom_call.1']
    #allocation23 [shape = 'u8[1024]{0}', space=vmem, size = 0x400, scoped, tag = 'input window, operand 12']
    #allocation24 [shape = 'u8[16384]{0}', space=vmem, size = 0x4000, scoped, tag = 'input window, operand 13']
    #allocation25 [shape = 's32[2]{0}', space=sflag, size = 0x8, scoped, tag = 'scoped memory for tpu_custom_call.1']
    #allocation26 [shape = 'u8[1024]{0}', space=vmem, size = 0x400, scoped, tag = 'input window, operand 14']
    #allocation27 [shape = 'u8[1024]{0}', space=vmem, size = 0x400, scoped, tag = 'input window, operand 15']
    #allocation28 [shape = 's32[2]{0}', space=sflag, size = 0x8, scoped, tag = 'scoped memory for tpu_custom_call.1']
    #allocation29 [shape = 'u8[1024]{0}', space=vmem, size = 0x400, scoped, tag = 'input window, operand 16']
    #allocation30 [shape = 'u8[8192]{0}', space=vmem, size = 0x2000, scoped, tag = 'output window, operand 0']
    %22 = vsyncpa [#allocation4], 0
    %s23 = scalar_lea.sflag [#allocation4], 1
    %24 = vsyncpa %s23, 0
    %25 = vsyncpa [#allocation7], 0
    %s26 = scalar_lea.sflag [#allocation7], 1
    %27 = vsyncpa %s26, 0
    %28 = vsyncpa [#allocation10], 0
    %s29 = scalar_lea.sflag [#allocation10], 1
    %30 = vsyncpa %s29, 0
    %31 = vsyncpa [#allocation13], 0
    %s32 = scalar_lea.sflag [#allocation13], 1
    %33 = vsyncpa %s32, 0
    %34 = vsyncpa [#allocation16], 0
    %s35 = scalar_lea.sflag [#allocation16], 1
    %36 = vsyncpa %s35, 0
    %37 = vsyncpa [#allocation19], 0
    %s38 = scalar_lea.sflag [#allocation19], 1
    %39 = vsyncpa %s38, 0
    %40 = vsyncpa [#allocation22], 0
    %s41 = scalar_lea.sflag [#allocation22], 1
    %42 = vsyncpa %s41, 0
    %43 = vsyncpa [#allocation25], 0
    %s44 = scalar_lea.sflag [#allocation25], 1
    %45 = vsyncpa %s44, 0
    %46 = vsyncpa [#allocation28], 0
    %s47 = scalar_lea.sflag [#allocation28], 1
    %48 = vsyncpa %s47, 0
    %49 = vsyncpa [#allocation5], 0
    %s50 = scalar_lea.sflag [#allocation5], 1
    %51 = vsyncpa %s50, 0
    loop: start=0, step=1, limit=6
    $region2: #{tpu_custom_call.1} parent=1 // loop_pre_header
      _
    $region3: #{tpu_custom_call.1} parent=1 // loop_header
      %s53 = sphi 0, %s57
      %p54 = scmp.ge.s32.totalorder %s53, 6
      %s60 = sphi 0, %s72
      %s61 = sphi 0, %s68
      %s62 = sphi 0, %s60
      %s63 = sphi 0, %s61
      %s64 = sphi 0, %s62
      %s65 = sphi 0, %s63
      %s75 = sphi 0, %s77
      %s78 = sphi 0, %s75
      %s79 = sphi 0, %s78
      %s95 = sphi 0, %s79
      %s101 = sphi 0, %s103
      %s104 = sphi 0, %s101
      %s105 = sphi 0, %s104
      %s121 = sphi 0, %s105
      %s125 = sphi 0, %s125
      %s127 = sphi 0, %s125
      %s128 = sphi 0, %s127
      %s142 = sphi 0, %s128
      %s148 = sphi 0, %s150
      %s151 = sphi 0, %s148
      %s152 = sphi 0, %s151
      %s168 = sphi 0, %s152
      %s174 = sphi 0, %s176
      %s177 = sphi 0, %s174
      %s178 = sphi 0, %s177
      %s194 = sphi 0, %s178
      %s200 = sphi 0, %s202
      %s203 = sphi 0, %s200
      %s204 = sphi 0, %s203
      %s220 = sphi 0, %s204
      %s226 = sphi 0, %s228
      %s229 = sphi 0, %s226
      %s230 = sphi 0, %s229
      %s246 = sphi 0, %s230
      %s252 = sphi 0, %s254
      %s255 = sphi 0, %s252
      %s256 = sphi 0, %s255
      %s272 = sphi 0, %s256
      %s278 = sphi 0, %s280
      %s281 = sphi 0, %s278
      %s282 = sphi 0, %s281
      %s298 = sphi 0, %s282
      %s304 = sphi 0, %s306
      %s307 = sphi 0, %s304
      %s308 = sphi 0, %s307
      %s324 = sphi 0, %s308
      %s330 = sphi 0, %s332
      %s333 = sphi 0, %s330
      %s334 = sphi 0, %s333
      %s350 = sphi 0, %s334
      %s356 = sphi 0, %s358
      %s359 = sphi 0, %s356
      %s360 = sphi 0, %s359
      %s376 = sphi 0, %s360
      %s382 = sphi 0, %s384
      %s385 = sphi 0, %s382
      %s386 = sphi 0, %s385
      %s402 = sphi 0, %s386
      %s408 = sphi 0, %s410
      %s411 = sphi 0, %s408
      %s412 = sphi 0, %s411
      %s428 = sphi 0, %s412
      %s434 = sphi 0, %s436
      %s437 = sphi 0, %s434
      %s438 = sphi 0, %s437
      %s454 = sphi 0, %s438
      %s460 = sphi 0, %s462
      %s463 = sphi 0, %s460
      %s464 = sphi 0, %s463
      %s480 = sphi 0, %s464
      %s486 = sphi 0, %s488
      %s489 = sphi 0, %s486
      %s490 = sphi 0, %s489
      %s506 = sphi 0, %s490
      %s512 = sphi 0, %s514
      %s515 = sphi 0, %s512
      %s516 = sphi 0, %s515
      %s532 = sphi 0, %s516
    $region4: #{tpu_custom_call.1} parent=1 // loop_header_branch
      %56 = sbr.rel (%p54) target = $region8
    $region5: #{tpu_custom_call.1} parent=1 // loop_body
      %s58 = ssub.s32 %s53, 1
      %s59 = ssub.s32 %s53, 2
      %s66 = sadd.s32 1, %s61
      %p67 = scmp.ge.s32.totalorder %s66, 2
      %s68 = scalar_select %p67, 0, %s66
      %s69 = sadd.s32 1, %s60
      %s70 = scalar_select %p67, %s69, %s60
      %p71 = scmp.ge.s32.totalorder %s70, 2
      %s72 = scalar_select %p71, 0, %s70
      %s73 = ssub.s32 %s60, %s72
      %p74 = scmp.eq.s32.totalorder %s73, 0
      %s76 = sadd.s32 %s75, 1
      %s77 = scalar_select %p74, %s75, %s76
      %p80 = pneg %p74
      %p81 = scmp.eq.s32.totalorder %s53, 3
      %p82 = por %p80, %p81
      %p83 = scmp.ne.s32.totalorder %s75, %s78
      %p84 = scmp.eq.s32.totalorder %s53, 0
      %p85 = por %p83, %p84
      %p86 = scmp.ne.s32.totalorder %s75, %s78
      %p87 = scmp.eq.s32.totalorder %s58, 3
      %p88 = por %p86, %p87
      %p89 = scmp.ne.s32.totalorder %s78, %s79
      %p90 = scmp.eq.s32.totalorder %s58, 0
      %p91 = por %p89, %p90
      %p92 = scmp.ne.s32.totalorder %s78, %s79
      %p93 = scmp.eq.s32.totalorder %s59, 3
      %p94 = por %p92, %p93
      %p96 = scmp.ne.s32.totalorder %s79, %s95
      %p97 = scmp.eq.s32.totalorder %s59, 0
      %p98 = por %p96, %p97
      %s99 = ssub.s32 %s60, %s72
      %p100 = scmp.eq.s32.totalorder %s99, 0
      %s102 = sadd.s32 %s101, 1
      %s103 = scalar_select %p100, %s101, %s102
      %p106 = pneg %p100
      %p107 = scmp.eq.s32.totalorder %s53, 3
      %p108 = por %p106, %p107
      %p109 = scmp.ne.s32.totalorder %s101, %s104
      %p110 = scmp.eq.s32.totalorder %s53, 0
      %p111 = por %p109, %p110
      %p112 = scmp.ne.s32.totalorder %s101, %s104
      %p113 = scmp.eq.s32.totalorder %s58, 3
      %p114 = por %p112, %p113
      %p115 = scmp.ne.s32.totalorder %s104, %s105
      %p116 = scmp.eq.s32.totalorder %s58, 0
      %p117 = por %p115, %p116
      %p118 = scmp.ne.s32.totalorder %s104, %s105
      %p119 = scmp.eq.s32.totalorder %s59, 3
      %p120 = por %p118, %p119
      %p122 = scmp.ne.s32.totalorder %s105, %s121
      %p123 = scmp.eq.s32.totalorder %s59, 0
      %p124 = por %p122, %p123
      %s126 = sadd.s32 %s125, 1
      %p129 = scmp.eq.s32.totalorder %s53, 3
      %p130 = scmp.ne.s32.totalorder %s125, %s127
      %p131 = scmp.eq.s32.totalorder %s53, 0
      %p132 = por %p130, %p131
      %p133 = scmp.ne.s32.totalorder %s125, %s127
      %p134 = scmp.eq.s32.totalorder %s58, 3
      %p135 = por %p133, %p134
      %p136 = scmp.ne.s32.totalorder %s127, %s128
      %p137 = scmp.eq.s32.totalorder %s58, 0
      %p138 = por %p136, %p137
      %p139 = scmp.ne.s32.totalorder %s127, %s128
      %p140 = scmp.eq.s32.totalorder %s59, 3
      %p141 = por %p139, %p140
      %p143 = scmp.ne.s32.totalorder %s128, %s142
      %p144 = scmp.eq.s32.totalorder %s59, 0
      %p145 = por %p143, %p144
      %s146 = ssub.s32 %s61, %s68
      %p147 = scmp.eq.s32.totalorder %s146, 0
      %s149 = sadd.s32 %s148, 1
      %s150 = scalar_select %p147, %s148, %s149
      %p153 = pneg %p147
      %p154 = scmp.eq.s32.totalorder %s53, 3
      %p155 = por %p153, %p154
      %p156 = scmp.ne.s32.totalorder %s148, %s151
      %p157 = scmp.eq.s32.totalorder %s53, 0
      %p158 = por %p156, %p157
      %p159 = scmp.ne.s32.totalorder %s148, %s151
      %p160 = scmp.eq.s32.totalorder %s58, 3
      %p161 = por %p159, %p160
      %p162 = scmp.ne.s32.totalorder %s151, %s152
      %p163 = scmp.eq.s32.totalorder %s58, 0
      %p164 = por %p162, %p163
      %p165 = scmp.ne.s32.totalorder %s151, %s152
      %p166 = scmp.eq.s32.totalorder %s59, 3
      %p167 = por %p165, %p166
      %p169 = scmp.ne.s32.totalorder %s152, %s168
      %p170 = scmp.eq.s32.totalorder %s59, 0
      %p171 = por %p169, %p170
      %s172 = ssub.s32 %s61, %s68
      %p173 = scmp.eq.s32.totalorder %s172, 0
      %s175 = sadd.s32 %s174, 1
      %s176 = scalar_select %p173, %s174, %s175
      %p179 = pneg %p173
      %p180 = scmp.eq.s32.totalorder %s53, 3
      %p181 = por %p179, %p180
      %p182 = scmp.ne.s32.totalorder %s174, %s177
      %p183 = scmp.eq.s32.totalorder %s53, 0
      %p184 = por %p182, %p183
      %p185 = scmp.ne.s32.totalorder %s174, %s177
      %p186 = scmp.eq.s32.totalorder %s58, 3
      %p187 = por %p185, %p186
      %p188 = scmp.ne.s32.totalorder %s177, %s178
      %p189 = scmp.eq.s32.totalorder %s58, 0
      %p190 = por %p188, %p189
      %p191 = scmp.ne.s32.totalorder %s177, %s178
      %p192 = scmp.eq.s32.totalorder %s59, 3
      %p193 = por %p191, %p192
      %p195 = scmp.ne.s32.totalorder %s178, %s194
      %p196 = scmp.eq.s32.totalorder %s59, 0
      %p197 = por %p195, %p196
      %s198 = ssub.s32 %s61, %s68
      %p199 = scmp.eq.s32.totalorder %s198, 0
      %s201 = sadd.s32 %s200, 1
      %s202 = scalar_select %p199, %s200, %s201
      %p205 = pneg %p199
      %p206 = scmp.eq.s32.totalorder %s53, 3
      %p207 = por %p205, %p206
      %p208 = scmp.ne.s32.totalorder %s200, %s203
      %p209 = scmp.eq.s32.totalorder %s53, 0
      %p210 = por %p208, %p209
      %p211 = scmp.ne.s32.totalorder %s200, %s203
      %p212 = scmp.eq.s32.totalorder %s58, 3
      %p213 = por %p211, %p212
      %p214 = scmp.ne.s32.totalorder %s203, %s204
      %p215 = scmp.eq.s32.totalorder %s58, 0
      %p216 = por %p214, %p215
      %p217 = scmp.ne.s32.totalorder %s203, %s204
      %p218 = scmp.eq.s32.totalorder %s59, 3
      %p219 = por %p217, %p218
      %p221 = scmp.ne.s32.totalorder %s204, %s220
      %p222 = scmp.eq.s32.totalorder %s59, 0
      %p223 = por %p221, %p222
      %s224 = ssub.s32 %s61, %s68
      %p225 = scmp.eq.s32.totalorder %s224, 0
      %s227 = sadd.s32 %s226, 1
      %s228 = scalar_select %p225, %s226, %s227
      %p231 = pneg %p225
      %p232 = scmp.eq.s32.totalorder %s53, 3
      %p233 = por %p231, %p232
      %p234 = scmp.ne.s32.totalorder %s226, %s229
      %p235 = scmp.eq.s32.totalorder %s53, 0
      %p236 = por %p234, %p235
      %p237 = scmp.ne.s32.totalorder %s226, %s229
      %p238 = scmp.eq.s32.totalorder %s58, 3
      %p239 = por %p237, %p238
      %p240 = scmp.ne.s32.totalorder %s229, %s230
      %p241 = scmp.eq.s32.totalorder %s58, 0
      %p242 = por %p240, %p241
      %p243 = scmp.ne.s32.totalorder %s229, %s230
      %p244 = scmp.eq.s32.totalorder %s59, 3
      %p245 = por %p243, %p244
      %p247 = scmp.ne.s32.totalorder %s230, %s246
      %p248 = scmp.eq.s32.totalorder %s59, 0
      %p249 = por %p247, %p248
      %s250 = ssub.s32 %s61, %s68
      %p251 = scmp.eq.s32.totalorder %s250, 0
      %s253 = sadd.s32 %s252, 1
      %s254 = scalar_select %p251, %s252, %s253
      %p257 = pneg %p251
      %p258 = scmp.eq.s32.totalorder %s53, 3
      %p259 = por %p257, %p258
      %p260 = scmp.ne.s32.totalorder %s252, %s255
      %p261 = scmp.eq.s32.totalorder %s53, 0
      %p262 = por %p260, %p261
      %p263 = scmp.ne.s32.totalorder %s252, %s255
      %p264 = scmp.eq.s32.totalorder %s58, 3
      %p265 = por %p263, %p264
      %p266 = scmp.ne.s32.totalorder %s255, %s256
      %p267 = scmp.eq.s32.totalorder %s58, 0
      %p268 = por %p266, %p267
      %p269 = scmp.ne.s32.totalorder %s255, %s256
      %p270 = scmp.eq.s32.totalorder %s59, 3
      %p271 = por %p269, %p270
      %p273 = scmp.ne.s32.totalorder %s256, %s272
      %p274 = scmp.eq.s32.totalorder %s59, 0
      %p275 = por %p273, %p274
      %s276 = ssub.s32 %s61, %s68
      %p277 = scmp.eq.s32.totalorder %s276, 0
      %s279 = sadd.s32 %s278, 1
      %s280 = scalar_select %p277, %s278, %s279
      %p283 = pneg %p277
      %p284 = scmp.eq.s32.totalorder %s53, 3
      %p285 = por %p283, %p284
      %p286 = scmp.ne.s32.totalorder %s278, %s281
      %p287 = scmp.eq.s32.totalorder %s53, 0
      %p288 = por %p286, %p287
      %p289 = scmp.ne.s32.totalorder %s278, %s281
      %p290 = scmp.eq.s32.totalorder %s58, 3
      %p291 = por %p289, %p290
      %p292 = scmp.ne.s32.totalorder %s281, %s282
      %p293 = scmp.eq.s32.totalorder %s58, 0
      %p294 = por %p292, %p293
      %p295 = scmp.ne.s32.totalorder %s281, %s282
      %p296 = scmp.eq.s32.totalorder %s59, 3
      %p297 = por %p295, %p296
      %p299 = scmp.ne.s32.totalorder %s282, %s298
      %p300 = scmp.eq.s32.totalorder %s59, 0
      %p301 = por %p299, %p300
      %s302 = ssub.s32 %s61, %s68
      %p303 = scmp.eq.s32.totalorder %s302, 0
      %s305 = sadd.s32 %s304, 1
      %s306 = scalar_select %p303, %s304, %s305
      %p309 = pneg %p303
      %p310 = scmp.eq.s32.totalorder %s53, 3
      %p311 = por %p309, %p310
      %p312 = scmp.ne.s32.totalorder %s304, %s307
      %p313 = scmp.eq.s32.totalorder %s53, 0
      %p314 = por %p312, %p313
      %p315 = scmp.ne.s32.totalorder %s304, %s307
      %p316 = scmp.eq.s32.totalorder %s58, 3
      %p317 = por %p315, %p316
      %p318 = scmp.ne.s32.totalorder %s307, %s308
      %p319 = scmp.eq.s32.totalorder %s58, 0
      %p320 = por %p318, %p319
      %p321 = scmp.ne.s32.totalorder %s307, %s308
      %p322 = scmp.eq.s32.totalorder %s59, 3
      %p323 = por %p321, %p322
      %p325 = scmp.ne.s32.totalorder %s308, %s324
      %p326 = scmp.eq.s32.totalorder %s59, 0
      %p327 = por %p325, %p326
      %s328 = ssub.s32 %s61, %s68
      %p329 = scmp.eq.s32.totalorder %s328, 0
      %s331 = sadd.s32 %s330, 1
      %s332 = scalar_select %p329, %s330, %s331
      %p335 = pneg %p329
      %p336 = scmp.eq.s32.totalorder %s53, 3
      %p337 = por %p335, %p336
      %p338 = scmp.ne.s32.totalorder %s330, %s333
      %p339 = scmp.eq.s32.totalorder %s53, 0
      %p340 = por %p338, %p339
      %p341 = scmp.ne.s32.totalorder %s330, %s333
      %p342 = scmp.eq.s32.totalorder %s58, 3
      %p343 = por %p341, %p342
      %p344 = scmp.ne.s32.totalorder %s333, %s334
      %p345 = scmp.eq.s32.totalorder %s58, 0
      %p346 = por %p344, %p345
      %p347 = scmp.ne.s32.totalorder %s333, %s334
      %p348 = scmp.eq.s32.totalorder %s59, 3
      %p349 = por %p347, %p348
      %p351 = scmp.ne.s32.totalorder %s334, %s350
      %p352 = scmp.eq.s32.totalorder %s59, 0
      %p353 = por %p351, %p352
      %s354 = ssub.s32 %s61, %s68
      %p355 = scmp.eq.s32.totalorder %s354, 0
      %s357 = sadd.s32 %s356, 1
      %s358 = scalar_select %p355, %s356, %s357
      %p361 = pneg %p355
      %p362 = scmp.eq.s32.totalorder %s53, 3
      %p363 = por %p361, %p362
      %p364 = scmp.ne.s32.totalorder %s356, %s359
      %p365 = scmp.eq.s32.totalorder %s53, 0
      %p366 = por %p364, %p365
      %p367 = scmp.ne.s32.totalorder %s356, %s359
      %p368 = scmp.eq.s32.totalorder %s58, 3
      %p369 = por %p367, %p368
      %p370 = scmp.ne.s32.totalorder %s359, %s360
      %p371 = scmp.eq.s32.totalorder %s58, 0
      %p372 = por %p370, %p371
      %p373 = scmp.ne.s32.totalorder %s359, %s360
      %p374 = scmp.eq.s32.totalorder %s59, 3
      %p375 = por %p373, %p374
      %p377 = scmp.ne.s32.totalorder %s360, %s376
      %p378 = scmp.eq.s32.totalorder %s59, 0
      %p379 = por %p377, %p378
      %s380 = ssub.s32 %s61, %s68
      %p381 = scmp.eq.s32.totalorder %s380, 0
      %s383 = sadd.s32 %s382, 1
      %s384 = scalar_select %p381, %s382, %s383
      %p387 = pneg %p381
      %p388 = scmp.eq.s32.totalorder %s53, 3
      %p389 = por %p387, %p388
      %p390 = scmp.ne.s32.totalorder %s382, %s385
      %p391 = scmp.eq.s32.totalorder %s53, 0
      %p392 = por %p390, %p391
      %p393 = scmp.ne.s32.totalorder %s382, %s385
      %p394 = scmp.eq.s32.totalorder %s58, 3
      %p395 = por %p393, %p394
      %p396 = scmp.ne.s32.totalorder %s385, %s386
      %p397 = scmp.eq.s32.totalorder %s58, 0
      %p398 = por %p396, %p397
      %p399 = scmp.ne.s32.totalorder %s385, %s386
      %p400 = scmp.eq.s32.totalorder %s59, 3
      %p401 = por %p399, %p400
      %p403 = scmp.ne.s32.totalorder %s386, %s402
      %p404 = scmp.eq.s32.totalorder %s59, 0
      %p405 = por %p403, %p404
      %s406 = ssub.s32 %s61, %s68
      %p407 = scmp.eq.s32.totalorder %s406, 0
      %s409 = sadd.s32 %s408, 1
      %s410 = scalar_select %p407, %s408, %s409
      %p413 = pneg %p407
      %p414 = scmp.eq.s32.totalorder %s53, 3
      %p415 = por %p413, %p414
      %p416 = scmp.ne.s32.totalorder %s408, %s411
      %p417 = scmp.eq.s32.totalorder %s53, 0
      %p418 = por %p416, %p417
      %p419 = scmp.ne.s32.totalorder %s408, %s411
      %p420 = scmp.eq.s32.totalorder %s58, 3
      %p421 = por %p419, %p420
      %p422 = scmp.ne.s32.totalorder %s411, %s412
      %p423 = scmp.eq.s32.totalorder %s58, 0
      %p424 = por %p422, %p423
      %p425 = scmp.ne.s32.totalorder %s411, %s412
      %p426 = scmp.eq.s32.totalorder %s59, 3
      %p427 = por %p425, %p426
      %p429 = scmp.ne.s32.totalorder %s412, %s428
      %p430 = scmp.eq.s32.totalorder %s59, 0
      %p431 = por %p429, %p430
      %s432 = ssub.s32 %s61, %s68
      %p433 = scmp.eq.s32.totalorder %s432, 0
      %s435 = sadd.s32 %s434, 1
      %s436 = scalar_select %p433, %s434, %s435
      %p439 = pneg %p433
      %p440 = scmp.eq.s32.totalorder %s53, 3
      %p441 = por %p439, %p440
      %p442 = scmp.ne.s32.totalorder %s434, %s437
      %p443 = scmp.eq.s32.totalorder %s53, 0
      %p444 = por %p442, %p443
      %p445 = scmp.ne.s32.totalorder %s434, %s437
      %p446 = scmp.eq.s32.totalorder %s58, 3
      %p447 = por %p445, %p446
      %p448 = scmp.ne.s32.totalorder %s437, %s438
      %p449 = scmp.eq.s32.totalorder %s58, 0
      %p450 = por %p448, %p449
      %p451 = scmp.ne.s32.totalorder %s437, %s438
      %p452 = scmp.eq.s32.totalorder %s59, 3
      %p453 = por %p451, %p452
      %p455 = scmp.ne.s32.totalorder %s438, %s454
      %p456 = scmp.eq.s32.totalorder %s59, 0
      %p457 = por %p455, %p456
      %s458 = ssub.s32 %s61, %s68
      %p459 = scmp.eq.s32.totalorder %s458, 0
      %s461 = sadd.s32 %s460, 1
      %s462 = scalar_select %p459, %s460, %s461
      %p465 = pneg %p459
      %p466 = scmp.eq.s32.totalorder %s53, 3
      %p467 = por %p465, %p466
      %p468 = scmp.ne.s32.totalorder %s460, %s463
      %p469 = scmp.eq.s32.totalorder %s53, 0
      %p470 = por %p468, %p469
      %p471 = scmp.ne.s32.totalorder %s460, %s463
      %p472 = scmp.eq.s32.totalorder %s58, 3
      %p473 = por %p471, %p472
      %p474 = scmp.ne.s32.totalorder %s463, %s464
      %p475 = scmp.eq.s32.totalorder %s58, 0
      %p476 = por %p474, %p475
      %p477 = scmp.ne.s32.totalorder %s463, %s464
      %p478 = scmp.eq.s32.totalorder %s59, 3
      %p479 = por %p477, %p478
      %p481 = scmp.ne.s32.totalorder %s464, %s480
      %p482 = scmp.eq.s32.totalorder %s59, 0
      %p483 = por %p481, %p482
      %s484 = ssub.s32 %s61, %s68
      %p485 = scmp.eq.s32.totalorder %s484, 0
      %s487 = sadd.s32 %s486, 1
      %s488 = scalar_select %p485, %s486, %s487
      %p491 = pneg %p485
      %p492 = scmp.eq.s32.totalorder %s53, 3
      %p493 = por %p491, %p492
      %p494 = scmp.ne.s32.totalorder %s486, %s489
      %p495 = scmp.eq.s32.totalorder %s53, 0
      %p496 = por %p494, %p495
      %p497 = scmp.ne.s32.totalorder %s486, %s489
      %p498 = scmp.eq.s32.totalorder %s58, 3
      %p499 = por %p497, %p498
      %p500 = scmp.ne.s32.totalorder %s489, %s490
      %p501 = scmp.eq.s32.totalorder %s58, 0
      %p502 = por %p500, %p501
      %p503 = scmp.ne.s32.totalorder %s489, %s490
      %p504 = scmp.eq.s32.totalorder %s59, 3
      %p505 = por %p503, %p504
      %p507 = scmp.ne.s32.totalorder %s490, %s506
      %p508 = scmp.eq.s32.totalorder %s59, 0
      %p509 = por %p507, %p508
      %s510 = ssub.s32 %s60, %s72
      %p511 = scmp.eq.s32.totalorder %s510, 0
      %s513 = sadd.s32 %s512, 1
      %s514 = scalar_select %p511, %s512, %s513
      %p517 = pneg %p511
      %p518 = scmp.eq.s32.totalorder %s53, 3
      %p519 = por %p517, %p518
      %p520 = scmp.ne.s32.totalorder %s512, %s515
      %p521 = scmp.eq.s32.totalorder %s53, 0
      %p522 = por %p520, %p521
      %p523 = scmp.ne.s32.totalorder %s512, %s515
      %p524 = scmp.eq.s32.totalorder %s58, 3
      %p525 = por %p523, %p524
      %p526 = scmp.ne.s32.totalorder %s515, %s516
      %p527 = scmp.eq.s32.totalorder %s58, 0
      %p528 = por %p526, %p527
      %p529 = scmp.ne.s32.totalorder %s515, %s516
      %p530 = scmp.eq.s32.totalorder %s59, 3
      %p531 = por %p529, %p530
      %p533 = scmp.ne.s32.totalorder %s516, %s532
      %p534 = scmp.eq.s32.totalorder %s59, 0
      %p535 = por %p533, %p534
      %p536 = scmp.le.s32.totalorder 1, %s53
      %p537 = scmp.lt.s32.totalorder %s53, 5
      %p538 = pnand %p536, %p537
      %p539 = pneg %p538
      // Predicated region
      $region9: #{tpu_custom_call.1} parent=5 // pred_check
        _
      $region10: #{tpu_custom_call.1} parent=5 // pred_check_branch
        %541 = sbr.rel (%p538) target = $region12
      $region11: #{tpu_custom_call.1} parent=5 // pred_region
        %s542 = ssub.s32 %s53, 1
        // Predicated region
        $region13: #{tpu_custom_call.1} parent=11 // pred_check
          %p543 = pneg %p138
        $region14: #{tpu_custom_call.1} parent=11 // pred_check_branch
          %545 = sbr.rel (%p543) target = $region16
        $region15: #{tpu_custom_call.1} parent=11 // pred_region
          %s547 = ssub.s32 128, 128
          %548 = vsyncadd [#allocation7], %s547
          %s550 = sshll.u32 [#allocation8], 4
          %s551 = int_to_ptr.vmem [resolvable:$true] %s550
          %553 = dma.hbm_to_vmem [thread:$0]  %s2, 128, %s551, [#allocation7]
        $region16: #{tpu_custom_call.1} parent=11 // pred_fallthru
          _
      $region12: #{tpu_custom_call.1} parent=5 // pred_fallthru
        _
      %p554 = scmp.lt.s32.totalorder %s53, 4
      // Predicated region
      $region17: #{tpu_custom_call.1} parent=5 // pred_check
        %p555 = pneg %p554
      $region18: #{tpu_custom_call.1} parent=5 // pred_check_branch
        %557 = sbr.rel (%p555) target = $region20
      $region19: #{tpu_custom_call.1} parent=5 // pred_region
        // Predicated region
        $region21: #{tpu_custom_call.1} parent=19 // pred_check
          %p558 = pneg %p85
        $region22: #{tpu_custom_call.1} parent=19 // pred_check_branch
          %560 = sbr.rel (%p558) target = $region24
        $region23: #{tpu_custom_call.1} parent=19 // pred_region
          %s561 = sand.u32 %s75, 1
          %s562 = scalar_lea.sflag [#allocation4], %s561
          %s563 = sand.u32 %s75, 1
          %s564 = smul.addr %s563, 8
          %s565 = scalar_lea.vmem [#allocation3], %s564
          %s567 = ssub.s32 128, 128
          %568 = vsyncadd %s562, %s567
          %s569 = smul.addr %s60, 128
          %s570 = scalar_lea.hbm %s0, %s569
          %s572 = sshll.u32 %s565, 4
          %s573 = int_to_ptr.vmem [resolvable:$true] %s572
          %575 = dma.hbm_to_vmem [thread:$0]  %s570, 128, %s573, %s562
        $region24: #{tpu_custom_call.1} parent=19 // pred_fallthru
          _
        // Predicated region
        $region25: #{tpu_custom_call.1} parent=19 // pred_check
          %p576 = pneg %p111
        $region26: #{tpu_custom_call.1} parent=19 // pred_check_branch
          %578 = sbr.rel (%p576) target = $region28
        $region27: #{tpu_custom_call.1} parent=19 // pred_region
          %s579 = sand.u32 %s53, 1
          %s580 = scalar_lea.sflag [#allocation7], %s579
          %s581 = sand.u32 %s101, 1
          %s582 = smul.addr %s581, 8
          %s583 = scalar_lea.vmem [#allocation6], %s582
          %s585 = ssub.s32 128, 128
          %586 = vsyncadd %s580, %s585
          %s587 = smul.addr %s60, 128
          %s588 = scalar_lea.hbm %s1, %s587
          %s590 = sshll.u32 %s583, 4
          %s591 = int_to_ptr.vmem [resolvable:$true] %s590
          %593 = dma.hbm_to_vmem [thread:$0]  %s588, 128, %s591, %s580
        $region28: #{tpu_custom_call.1} parent=19 // pred_fallthru
          _
        // Predicated region
        $region29: #{tpu_custom_call.1} parent=19 // pred_check
          %p594 = pneg %p158
        $region30: #{tpu_custom_call.1} parent=19 // pred_check_branch
          %596 = sbr.rel (%p594) target = $region32
        $region31: #{tpu_custom_call.1} parent=19 // pred_region
          %s597 = sand.u32 %s53, 1
          %s598 = scalar_lea.sflag [#allocation10], %s597
          %s599 = sand.u32 %s148, 1
          %s600 = smul.addr %s599, 16
          %s601 = scalar_lea.vmem [#allocation9], %s600
          %s603 = ssub.s32 256, 256
          %604 = vsyncadd %s598, %s603
          %s605 = smul.addr %s61, 4
          %s606 = smul.addr %s605, 64
          %s607 = scalar_lea.hbm %s3, %s606
          %s608 = sshll.u32 %s601, 4
          %s609 = int_to_ptr.vmem [resolvable:$true] %s608
          %614 = dma.hbm_to_vmem [thread:$0]  %s607, 256, %s609, %s598, 64, 64, 4
        $region32: #{tpu_custom_call.1} parent=19 // pred_fallthru
          _
        // Predicated region
        $region33: #{tpu_custom_call.1} parent=19 // pred_check
          %p615 = pneg %p184
        $region34: #{tpu_custom_call.1} parent=19 // pred_check_branch
          %617 = sbr.rel (%p615) target = $region36
        $region35: #{tpu_custom_call.1} parent=19 // pred_region
          %s618 = sand.u32 %s53, 1
          %s619 = scalar_lea.sflag [#allocation10], %s618
          %s620 = sand.u32 %s174, 1
          %s621 = scalar_lea.vmem [#allocation11], %s620
          %s623 = ssub.s32 16, 16
          %624 = vsyncadd %s619, %s623
          %s625 = smul.addr %s61, 16
          %s626 = scalar_lea.hbm %s4, %s625
          %s628 = sshll.u32 %s621, 4
          %s629 = int_to_ptr.vmem [resolvable:$true] %s628
          %631 = dma.hbm_to_vmem [thread:$0]  %s626, 16, %s629, %s619
        $region36: #{tpu_custom_call.1} parent=19 // pred_fallthru
          _
        // Predicated region
        $region37: #{tpu_custom_call.1} parent=19 // pred_check
          %p632 = pneg %p210
        $region38: #{tpu_custom_call.1} parent=19 // pred_check_branch
          %634 = sbr.rel (%p632) target = $region40
        $region39: #{tpu_custom_call.1} parent=19 // pred_region
          %s635 = sand.u32 %s53, 1
          %s636 = scalar_lea.sflag [#allocation13], %s635
          %s637 = sand.u32 %s200, 1
          %s638 = smul.addr %s637, 16
          %s639 = scalar_lea.vmem [#allocation12], %s638
          %s641 = ssub.s32 256, 256
          %642 = vsyncadd %s636, %s641
          %s643 = smul.addr %s61, 4
          %s644 = smul.addr %s643, 64
          %s645 = scalar_lea.hbm %s5, %s644
          %s646 = sshll.u32 %s639, 4
          %s647 = int_to_ptr.vmem [resolvable:$true] %s646
          %652 = dma.hbm_to_vmem [thread:$0]  %s645, 256, %s647, %s636, 64, 64, 4
        $region40: #{tpu_custom_call.1} parent=19 // pred_fallthru
          _
        // Predicated region
        $region41: #{tpu_custom_call.1} parent=19 // pred_check
          %p653 = pneg %p236
        $region42: #{tpu_custom_call.1} parent=19 // pred_check_branch
          %655 = sbr.rel (%p653) target = $region44
        $region43: #{tpu_custom_call.1} parent=19 // pred_region
          %s656 = sand.u32 %s53, 1
          %s657 = scalar_lea.sflag [#allocation13], %s656
          %s658 = sand.u32 %s226, 1
          %s659 = scalar_lea.vmem [#allocation14], %s658
          %s661 = ssub.s32 16, 16
          %662 = vsyncadd %s657, %s661
          %s663 = smul.addr %s61, 16
          %s664 = scalar_lea.hbm %s6, %s663
          %s666 = sshll.u32 %s659, 4
          %s667 = int_to_ptr.vmem [resolvable:$true] %s666
          %669 = dma.hbm_to_vmem [thread:$0]  %s664, 16, %s667, %s657
        $region44: #{tpu_custom_call.1} parent=19 // pred_fallthru
          _
        // Predicated region
        $region45: #{tpu_custom_call.1} parent=19 // pred_check
          %p670 = pneg %p262
        $region46: #{tpu_custom_call.1} parent=19 // pred_check_branch
          %672 = sbr.rel (%p670) target = $region48
        $region47: #{tpu_custom_call.1} parent=19 // pred_region
          %s673 = sand.u32 %s53, 1
          %s674 = scalar_lea.sflag [#allocation16], %s673
          %s675 = sand.u32 %s252, 1
          %s676 = smul.addr %s675, 16
          %s677 = scalar_lea.vmem [#allocation15], %s676
          %s679 = ssub.s32 256, 256
          %680 = vsyncadd %s674, %s679
          %s681 = smul.addr %s61, 4
          %s682 = smul.addr %s681, 64
          %s683 = scalar_lea.hbm %s7, %s682
          %s684 = sshll.u32 %s677, 4
          %s685 = int_to_ptr.vmem [resolvable:$true] %s684
          %690 = dma.hbm_to_vmem [thread:$0]  %s683, 256, %s685, %s674, 64, 64, 4
        $region48: #{tpu_custom_call.1} parent=19 // pred_fallthru
          _
        // Predicated region
        $region49: #{tpu_custom_call.1} parent=19 // pred_check
          %p691 = pneg %p288
        $region50: #{tpu_custom_call.1} parent=19 // pred_check_branch
          %693 = sbr.rel (%p691) target = $region52
        $region51: #{tpu_custom_call.1} parent=19 // pred_region
          %s694 = sand.u32 %s53, 1
          %s695 = scalar_lea.sflag [#allocation16], %s694
          %s696 = sand.u32 %s278, 1
          %s697 = scalar_lea.vmem [#allocation17], %s696
          %s699 = ssub.s32 16, 16
          %700 = vsyncadd %s695, %s699
          %s701 = smul.addr %s61, 16
          %s702 = scalar_lea.hbm %s8, %s701
          %s704 = sshll.u32 %s697, 4
          %s705 = int_to_ptr.vmem [resolvable:$true] %s704
          %707 = dma.hbm_to_vmem [thread:$0]  %s702, 16, %s705, %s695
        $region52: #{tpu_custom_call.1} parent=19 // pred_fallthru
          _
        // Predicated region
        $region53: #{tpu_custom_call.1} parent=19 // pred_check
          %p708 = pneg %p314
        $region54: #{tpu_custom_call.1} parent=19 // pred_check_branch
          %710 = sbr.rel (%p708) target = $region56
        $region55: #{tpu_custom_call.1} parent=19 // pred_region
          %s711 = sand.u32 %s53, 1
          %s712 = scalar_lea.sflag [#allocation19], %s711
          %s713 = sand.u32 %s304, 1
          %s714 = scalar_lea.vmem [#allocation18], %s713
          %s716 = ssub.s32 16, 16
          %717 = vsyncadd %s712, %s716
          %s718 = smul.addr %s61, 16
          %s719 = scalar_lea.hbm %s9, %s718
          %s721 = sshll.u32 %s714, 4
          %s722 = int_to_ptr.vmem [resolvable:$true] %s721
          %724 = dma.hbm_to_vmem [thread:$0]  %s719, 16, %s722, %s712
        $region56: #{tpu_custom_call.1} parent=19 // pred_fallthru
          _
        // Predicated region
        $region57: #{tpu_custom_call.1} parent=19 // pred_check
          %p725 = pneg %p340
        $region58: #{tpu_custom_call.1} parent=19 // pred_check_branch
          %727 = sbr.rel (%p725) target = $region60
        $region59: #{tpu_custom_call.1} parent=19 // pred_region
          %s728 = sand.u32 %s53, 1
          %s729 = scalar_lea.sflag [#allocation19], %s728
          %s730 = sand.u32 %s330, 1
          %s731 = scalar_lea.vmem [#allocation20], %s730
          %s733 = ssub.s32 16, 16
          %734 = vsyncadd %s729, %s733
          %s735 = smul.addr %s61, 16
          %s736 = scalar_lea.hbm %s10, %s735
          %s738 = sshll.u32 %s731, 4
          %s739 = int_to_ptr.vmem [resolvable:$true] %s738
          %741 = dma.hbm_to_vmem [thread:$0]  %s736, 16, %s739, %s729
        $region60: #{tpu_custom_call.1} parent=19 // pred_fallthru
          _
        // Predicated region
        $region61: #{tpu_custom_call.1} parent=19 // pred_check
          %p742 = pneg %p366
        $region62: #{tpu_custom_call.1} parent=19 // pred_check_branch
          %744 = sbr.rel (%p742) target = $region64
        $region63: #{tpu_custom_call.1} parent=19 // pred_region
          %s745 = sand.u32 %s53, 1
          %s746 = scalar_lea.sflag [#allocation22], %s745
          %s747 = sand.u32 %s356, 1
          %s748 = smul.addr %s747, 16
          %s749 = scalar_lea.vmem [#allocation21], %s748
          %s751 = ssub.s32 256, 256
          %752 = vsyncadd %s746, %s751
          %s753 = smul.addr %s61, 4
          %s754 = smul.addr %s753, 64
          %s755 = scalar_lea.hbm %s11, %s754
          %s756 = sshll.u32 %s749, 4
          %s757 = int_to_ptr.vmem [resolvable:$true] %s756
          %762 = dma.hbm_to_vmem [thread:$0]  %s755, 256, %s757, %s746, 64, 64, 4
        $region64: #{tpu_custom_call.1} parent=19 // pred_fallthru
          _
        // Predicated region
        $region65: #{tpu_custom_call.1} parent=19 // pred_check
          %p763 = pneg %p392
        $region66: #{tpu_custom_call.1} parent=19 // pred_check_branch
          %765 = sbr.rel (%p763) target = $region68
        $region67: #{tpu_custom_call.1} parent=19 // pred_region
          %s766 = sand.u32 %s53, 1
          %s767 = scalar_lea.sflag [#allocation22], %s766
          %s768 = sand.u32 %s382, 1
          %s769 = scalar_lea.vmem [#allocation23], %s768
          %s771 = ssub.s32 16, 16
          %772 = vsyncadd %s767, %s771
          %s773 = smul.addr %s61, 16
          %s774 = scalar_lea.hbm %s12, %s773
          %s776 = sshll.u32 %s769, 4
          %s777 = int_to_ptr.vmem [resolvable:$true] %s776
          %779 = dma.hbm_to_vmem [thread:$0]  %s774, 16, %s777, %s767
        $region68: #{tpu_custom_call.1} parent=19 // pred_fallthru
          _
        // Predicated region
        $region69: #{tpu_custom_call.1} parent=19 // pred_check
          %p780 = pneg %p418
        $region70: #{tpu_custom_call.1} parent=19 // pred_check_branch
          %782 = sbr.rel (%p780) target = $region72
        $region71: #{tpu_custom_call.1} parent=19 // pred_region
          %s783 = sand.u32 %s53, 1
          %s784 = scalar_lea.sflag [#allocation25], %s783
          %s785 = sand.u32 %s408, 1
          %s786 = smul.addr %s785, 16
          %s787 = scalar_lea.vmem [#allocation24], %s786
          %s789 = ssub.s32 256, 256
          %790 = vsyncadd %s784, %s789
          %s791 = smul.addr %s61, 4
          %s792 = smul.addr %s791, 64
          %s793 = scalar_lea.hbm %s13, %s792
          %s794 = sshll.u32 %s787, 4
          %s795 = int_to_ptr.vmem [resolvable:$true] %s794
          %800 = dma.hbm_to_vmem [thread:$0]  %s793, 256, %s795, %s784, 64, 64, 4
        $region72: #{tpu_custom_call.1} parent=19 // pred_fallthru
          _
        // Predicated region
        $region73: #{tpu_custom_call.1} parent=19 // pred_check
          %p801 = pneg %p444
        $region74: #{tpu_custom_call.1} parent=19 // pred_check_branch
          %803 = sbr.rel (%p801) target = $region76
        $region75: #{tpu_custom_call.1} parent=19 // pred_region
          %s804 = sand.u32 %s53, 1
          %s805 = scalar_lea.sflag [#allocation25], %s804
          %s806 = sand.u32 %s434, 1
          %s807 = scalar_lea.vmem [#allocation26], %s806
          %s809 = ssub.s32 16, 16
          %810 = vsyncadd %s805, %s809
          %s811 = smul.addr %s61, 16
          %s812 = scalar_lea.hbm %s14, %s811
          %s814 = sshll.u32 %s807, 4
          %s815 = int_to_ptr.vmem [resolvable:$true] %s814
          %817 = dma.hbm_to_vmem [thread:$0]  %s812, 16, %s815, %s805
        $region76: #{tpu_custom_call.1} parent=19 // pred_fallthru
          _
        // Predicated region
        $region77: #{tpu_custom_call.1} parent=19 // pred_check
          %p818 = pneg %p470
        $region78: #{tpu_custom_call.1} parent=19 // pred_check_branch
          %820 = sbr.rel (%p818) target = $region80
        $region79: #{tpu_custom_call.1} parent=19 // pred_region
          %s821 = sand.u32 %s53, 1
          %s822 = scalar_lea.sflag [#allocation28], %s821
          %s823 = sand.u32 %s460, 1
          %s824 = scalar_lea.vmem [#allocation27], %s823
          %s826 = ssub.s32 16, 16
          %827 = vsyncadd %s822, %s826
          %s828 = smul.addr %s61, 16
          %s829 = scalar_lea.hbm %s15, %s828
          %s831 = sshll.u32 %s824, 4
          %s832 = int_to_ptr.vmem [resolvable:$true] %s831
          %834 = dma.hbm_to_vmem [thread:$0]  %s829, 16, %s832, %s822
        $region80: #{tpu_custom_call.1} parent=19 // pred_fallthru
          _
        // Predicated region
        $region81: #{tpu_custom_call.1} parent=19 // pred_check
          %p835 = pneg %p496
        $region82: #{tpu_custom_call.1} parent=19 // pred_check_branch
          %837 = sbr.rel (%p835) target = $region84
        $region83: #{tpu_custom_call.1} parent=19 // pred_region
          %s838 = sand.u32 %s53, 1
          %s839 = scalar_lea.sflag [#allocation28], %s838
          %s840 = sand.u32 %s486, 1
          %s841 = scalar_lea.vmem [#allocation29], %s840
          %s843 = ssub.s32 16, 16
          %844 = vsyncadd %s839, %s843
          %s845 = smul.addr %s61, 16
          %s846 = scalar_lea.hbm %s16, %s845
          %s848 = sshll.u32 %s841, 4
          %s849 = int_to_ptr.vmem [resolvable:$true] %s848
          %851 = dma.hbm_to_vmem [thread:$0]  %s846, 16, %s849, %s839
        $region84: #{tpu_custom_call.1} parent=19 // pred_fallthru
          _
      $region20: #{tpu_custom_call.1} parent=5 // pred_fallthru
        _
      %p852 = scmp.le.s32.totalorder 1, %s53
      %p853 = scmp.lt.s32.totalorder %s53, 5
      %p854 = pnand %p852, %p853
      %p855 = pneg %p854
      // Predicated region
      $region85: #{tpu_custom_call.1} parent=5 // pred_check
        _
      $region86: #{tpu_custom_call.1} parent=5 // pred_check_branch
        %857 = sbr.rel (%p854) target = $region88
      $region87: #{tpu_custom_call.1} parent=5 // pred_region
        %s858 = ssub.s32 %s53, 1
        %s859 = sand.u32 %s78, 1
        %s860 = scalar_lea.sflag [#allocation4], %s859
        %s861 = sand.u32 %s78, 1
        %s862 = smul.addr %s861, 8
        %s863 = scalar_lea.vmem [#allocation3], %s862
        // Predicated region
        $region89: #{tpu_custom_call.1} parent=87 // pred_check
          %p864 = pneg %p91
        $region90: #{tpu_custom_call.1} parent=87 // pred_check_branch
          %866 = sbr.rel (%p864) target = $region92
        $region91: #{tpu_custom_call.1} parent=87 // pred_region
          %867 = dma.done %s860, 128
        $region92: #{tpu_custom_call.1} parent=87 // pred_fallthru
          _
        %s868 = sand.u32 %s58, 1
        %s869 = scalar_lea.sflag [#allocation7], %s868
        %s870 = sand.u32 %s104, 1
        %s871 = smul.addr %s870, 8
        %s872 = scalar_lea.vmem [#allocation6], %s871
        // Predicated region
        $region93: #{tpu_custom_call.1} parent=87 // pred_check
          %p873 = pneg %p117
        $region94: #{tpu_custom_call.1} parent=87 // pred_check_branch
          %875 = sbr.rel (%p873) target = $region96
        $region95: #{tpu_custom_call.1} parent=87 // pred_region
          %876 = dma.done %s869, 128
        $region96: #{tpu_custom_call.1} parent=87 // pred_fallthru
          _
        // Predicated region
        $region97: #{tpu_custom_call.1} parent=87 // pred_check
          %p877 = pneg %p138
        $region98: #{tpu_custom_call.1} parent=87 // pred_check_branch
          %879 = sbr.rel (%p877) target = $region100
        $region99: #{tpu_custom_call.1} parent=87 // pred_region
          %880 = dma.done [#allocation7], 128
        $region100: #{tpu_custom_call.1} parent=87 // pred_fallthru
          _
        %s881 = sand.u32 %s58, 1
        %s882 = scalar_lea.sflag [#allocation10], %s881
        %s883 = sand.u32 %s151, 1
        %s884 = smul.addr %s883, 16
        %s885 = scalar_lea.vmem [#allocation9], %s884
        // Predicated region
        $region101: #{tpu_custom_call.1} parent=87 // pred_check
          %p886 = pneg %p164
        $region102: #{tpu_custom_call.1} parent=87 // pred_check_branch
          %888 = sbr.rel (%p886) target = $region104
        $region103: #{tpu_custom_call.1} parent=87 // pred_region
          %889 = dma.done %s882, 256
        $region104: #{tpu_custom_call.1} parent=87 // pred_fallthru
          _
        %s890 = sand.u32 %s58, 1
        %s891 = scalar_lea.sflag [#allocation10], %s890
        %s892 = sand.u32 %s177, 1
        %s893 = scalar_lea.vmem [#allocation11], %s892
        // Predicated region
        $region105: #{tpu_custom_call.1} parent=87 // pred_check
          %p894 = pneg %p190
        $region106: #{tpu_custom_call.1} parent=87 // pred_check_branch
          %896 = sbr.rel (%p894) target = $region108
        $region107: #{tpu_custom_call.1} parent=87 // pred_region
          %897 = dma.done %s891, 16
        $region108: #{tpu_custom_call.1} parent=87 // pred_fallthru
          _
        %s898 = sand.u32 %s58, 1
        %s899 = scalar_lea.sflag [#allocation13], %s898
        %s900 = sand.u32 %s203, 1
        %s901 = smul.addr %s900, 16
        %s902 = scalar_lea.vmem [#allocation12], %s901
        // Predicated region
        $region109: #{tpu_custom_call.1} parent=87 // pred_check
          %p903 = pneg %p216
        $region110: #{tpu_custom_call.1} parent=87 // pred_check_branch
          %905 = sbr.rel (%p903) target = $region112
        $region111: #{tpu_custom_call.1} parent=87 // pred_region
          %906 = dma.done %s899, 256
        $region112: #{tpu_custom_call.1} parent=87 // pred_fallthru
          _
        %s907 = sand.u32 %s58, 1
        %s908 = scalar_lea.sflag [#allocation13], %s907
        %s909 = sand.u32 %s229, 1
        %s910 = scalar_lea.vmem [#allocation14], %s909
        // Predicated region
        $region113: #{tpu_custom_call.1} parent=87 // pred_check
          %p911 = pneg %p242
        $region114: #{tpu_custom_call.1} parent=87 // pred_check_branch
          %913 = sbr.rel (%p911) target = $region116
        $region115: #{tpu_custom_call.1} parent=87 // pred_region
          %914 = dma.done %s908, 16
        $region116: #{tpu_custom_call.1} parent=87 // pred_fallthru
          _
        %s915 = sand.u32 %s58, 1
        %s916 = scalar_lea.sflag [#allocation16], %s915
        %s917 = sand.u32 %s255, 1
        %s918 = smul.addr %s917, 16
        %s919 = scalar_lea.vmem [#allocation15], %s918
        // Predicated region
        $region117: #{tpu_custom_call.1} parent=87 // pred_check
          %p920 = pneg %p268
        $region118: #{tpu_custom_call.1} parent=87 // pred_check_branch
          %922 = sbr.rel (%p920) target = $region120
        $region119: #{tpu_custom_call.1} parent=87 // pred_region
          %923 = dma.done %s916, 256
        $region120: #{tpu_custom_call.1} parent=87 // pred_fallthru
          _
        %s924 = sand.u32 %s58, 1
        %s925 = scalar_lea.sflag [#allocation16], %s924
        %s926 = sand.u32 %s281, 1
        %s927 = scalar_lea.vmem [#allocation17], %s926
        // Predicated region
        $region121: #{tpu_custom_call.1} parent=87 // pred_check
          %p928 = pneg %p294
        $region122: #{tpu_custom_call.1} parent=87 // pred_check_branch
          %930 = sbr.rel (%p928) target = $region124
        $region123: #{tpu_custom_call.1} parent=87 // pred_region
          %931 = dma.done %s925, 16
        $region124: #{tpu_custom_call.1} parent=87 // pred_fallthru
          _
        %s932 = sand.u32 %s58, 1
        %s933 = scalar_lea.sflag [#allocation19], %s932
        %s934 = sand.u32 %s307, 1
        %s935 = scalar_lea.vmem [#allocation18], %s934
        // Predicated region
        $region125: #{tpu_custom_call.1} parent=87 // pred_check
          %p936 = pneg %p320
        $region126: #{tpu_custom_call.1} parent=87 // pred_check_branch
          %938 = sbr.rel (%p936) target = $region128
        $region127: #{tpu_custom_call.1} parent=87 // pred_region
          %939 = dma.done %s933, 16
        $region128: #{tpu_custom_call.1} parent=87 // pred_fallthru
          _
        %s940 = sand.u32 %s58, 1
        %s941 = scalar_lea.sflag [#allocation19], %s940
        %s942 = sand.u32 %s333, 1
        %s943 = scalar_lea.vmem [#allocation20], %s942
        // Predicated region
        $region129: #{tpu_custom_call.1} parent=87 // pred_check
          %p944 = pneg %p346
        $region130: #{tpu_custom_call.1} parent=87 // pred_check_branch
          %946 = sbr.rel (%p944) target = $region132
        $region131: #{tpu_custom_call.1} parent=87 // pred_region
          %947 = dma.done %s941, 16
        $region132: #{tpu_custom_call.1} parent=87 // pred_fallthru
          _
        %s948 = sand.u32 %s58, 1
        %s949 = scalar_lea.sflag [#allocation22], %s948
        %s950 = sand.u32 %s359, 1
        %s951 = smul.addr %s950, 16
        %s952 = scalar_lea.vmem [#allocation21], %s951
        // Predicated region
        $region133: #{tpu_custom_call.1} parent=87 // pred_check
          %p953 = pneg %p372
        $region134: #{tpu_custom_call.1} parent=87 // pred_check_branch
          %955 = sbr.rel (%p953) target = $region136
        $region135: #{tpu_custom_call.1} parent=87 // pred_region
          %956 = dma.done %s949, 256
        $region136: #{tpu_custom_call.1} parent=87 // pred_fallthru
          _
        %s957 = sand.u32 %s58, 1
        %s958 = scalar_lea.sflag [#allocation22], %s957
        %s959 = sand.u32 %s385, 1
        %s960 = scalar_lea.vmem [#allocation23], %s959
        // Predicated region
        $region137: #{tpu_custom_call.1} parent=87 // pred_check
          %p961 = pneg %p398
        $region138: #{tpu_custom_call.1} parent=87 // pred_check_branch
          %963 = sbr.rel (%p961) target = $region140
        $region139: #{tpu_custom_call.1} parent=87 // pred_region
          %964 = dma.done %s958, 16
        $region140: #{tpu_custom_call.1} parent=87 // pred_fallthru
          _
        %s965 = sand.u32 %s58, 1
        %s966 = scalar_lea.sflag [#allocation25], %s965
        %s967 = sand.u32 %s411, 1
        %s968 = smul.addr %s967, 16
        %s969 = scalar_lea.vmem [#allocation24], %s968
        // Predicated region
        $region141: #{tpu_custom_call.1} parent=87 // pred_check
          %p970 = pneg %p424
        $region142: #{tpu_custom_call.1} parent=87 // pred_check_branch
          %972 = sbr.rel (%p970) target = $region144
        $region143: #{tpu_custom_call.1} parent=87 // pred_region
          %973 = dma.done %s966, 256
        $region144: #{tpu_custom_call.1} parent=87 // pred_fallthru
          _
        %s974 = sand.u32 %s58, 1
        %s975 = scalar_lea.sflag [#allocation25], %s974
        %s976 = sand.u32 %s437, 1
        %s977 = scalar_lea.vmem [#allocation26], %s976
        // Predicated region
        $region145: #{tpu_custom_call.1} parent=87 // pred_check
          %p978 = pneg %p450
        $region146: #{tpu_custom_call.1} parent=87 // pred_check_branch
          %980 = sbr.rel (%p978) target = $region148
        $region147: #{tpu_custom_call.1} parent=87 // pred_region
          %981 = dma.done %s975, 16
        $region148: #{tpu_custom_call.1} parent=87 // pred_fallthru
          _
        %s982 = sand.u32 %s58, 1
        %s983 = scalar_lea.sflag [#allocation28], %s982
        %s984 = sand.u32 %s463, 1
        %s985 = scalar_lea.vmem [#allocation27], %s984
        // Predicated region
        $region149: #{tpu_custom_call.1} parent=87 // pred_check
          %p986 = pneg %p476
        $region150: #{tpu_custom_call.1} parent=87 // pred_check_branch
          %988 = sbr.rel (%p986) target = $region152
        $region151: #{tpu_custom_call.1} parent=87 // pred_region
          %989 = dma.done %s983, 16
        $region152: #{tpu_custom_call.1} parent=87 // pred_fallthru
          _
        %s990 = sand.u32 %s58, 1
        %s991 = scalar_lea.sflag [#allocation28], %s990
        %s992 = sand.u32 %s489, 1
        %s993 = scalar_lea.vmem [#allocation29], %s992
        // Predicated region
        $region153: #{tpu_custom_call.1} parent=87 // pred_check
          %p994 = pneg %p502
        $region154: #{tpu_custom_call.1} parent=87 // pred_check_branch
          %996 = sbr.rel (%p994) target = $region156
        $region155: #{tpu_custom_call.1} parent=87 // pred_region
          %997 = dma.done %s991, 16
        $region156: #{tpu_custom_call.1} parent=87 // pred_fallthru
          _
        %s998 = sand.u32 %s78, 1
        %s999 = scalar_lea.sflag [#allocation4], %s998
        %s1000 = sand.u32 %s78, 1
        %s1001 = smul.addr %s1000, 8
        %s1002 = scalar_lea.vmem [#allocation3], %s1001
        %p1003 = pneg %p91
        %p1004 = pneg %p88
        %s1005 = sand.u32 %s58, 1
        %s1006 = scalar_lea.sflag [#allocation7], %s1005
        %s1007 = sand.u32 %s104, 1
        %s1008 = smul.addr %s1007, 8
        %s1009 = scalar_lea.vmem [#allocation6], %s1008
        %p1010 = pneg %p117
        %p1011 = pneg %p114
        %p1012 = pneg %p138
        %p1013 = pneg %p135
        %s1014 = sand.u32 %s58, 1
        %s1015 = scalar_lea.sflag [#allocation10], %s1014
        %s1016 = sand.u32 %s151, 1
        %s1017 = smul.addr %s1016, 16
        %s1018 = scalar_lea.vmem [#allocation9], %s1017
        %p1019 = pneg %p164
        %p1020 = pneg %p161
        %s1021 = sand.u32 %s58, 1
        %s1022 = scalar_lea.sflag [#allocation10], %s1021
        %s1023 = sand.u32 %s177, 1
        %s1024 = scalar_lea.vmem [#allocation11], %s1023
        %p1025 = pneg %p190
        %p1026 = pneg %p187
        %s1027 = sand.u32 %s58, 1
        %s1028 = scalar_lea.sflag [#allocation13], %s1027
        %s1029 = sand.u32 %s203, 1
        %s1030 = smul.addr %s1029, 16
        %s1031 = scalar_lea.vmem [#allocation12], %s1030
        %p1032 = pneg %p216
        %p1033 = pneg %p213
        %s1034 = sand.u32 %s58, 1
        %s1035 = scalar_lea.sflag [#allocation13], %s1034
        %s1036 = sand.u32 %s229, 1
        %s1037 = scalar_lea.vmem [#allocation14], %s1036
        %p1038 = pneg %p242
        %p1039 = pneg %p239
        %s1040 = sand.u32 %s58, 1
        %s1041 = scalar_lea.sflag [#allocation16], %s1040
        %s1042 = sand.u32 %s255, 1
        %s1043 = smul.addr %s1042, 16
        %s1044 = scalar_lea.vmem [#allocation15], %s1043
        %p1045 = pneg %p268
        %p1046 = pneg %p265
        %s1047 = sand.u32 %s58, 1
        %s1048 = scalar_lea.sflag [#allocation16], %s1047
        %s1049 = sand.u32 %s281, 1
        %s1050 = scalar_lea.vmem [#allocation17], %s1049
        %p1051 = pneg %p294
        %p1052 = pneg %p291
        %s1053 = sand.u32 %s58, 1
        %s1054 = scalar_lea.sflag [#allocation19], %s1053
        %s1055 = sand.u32 %s307, 1
        %s1056 = scalar_lea.vmem [#allocation18], %s1055
        %p1057 = pneg %p320
        %p1058 = pneg %p317
        %s1059 = sand.u32 %s58, 1
        %s1060 = scalar_lea.sflag [#allocation19], %s1059
        %s1061 = sand.u32 %s333, 1
        %s1062 = scalar_lea.vmem [#allocation20], %s1061
        %p1063 = pneg %p346
        %p1064 = pneg %p343
        %s1065 = sand.u32 %s58, 1
        %s1066 = scalar_lea.sflag [#allocation22], %s1065
        %s1067 = sand.u32 %s359, 1
        %s1068 = smul.addr %s1067, 16
        %s1069 = scalar_lea.vmem [#allocation21], %s1068
        %p1070 = pneg %p372
        %p1071 = pneg %p369
        %s1072 = sand.u32 %s58, 1
        %s1073 = scalar_lea.sflag [#allocation22], %s1072
        %s1074 = sand.u32 %s385, 1
        %s1075 = scalar_lea.vmem [#allocation23], %s1074
        %p1076 = pneg %p398
        %p1077 = pneg %p395
        %s1078 = sand.u32 %s58, 1
        %s1079 = scalar_lea.sflag [#allocation25], %s1078
        %s1080 = sand.u32 %s411, 1
        %s1081 = smul.addr %s1080, 16
        %s1082 = scalar_lea.vmem [#allocation24], %s1081
        %p1083 = pneg %p424
        %p1084 = pneg %p421
        %s1085 = sand.u32 %s58, 1
        %s1086 = scalar_lea.sflag [#allocation25], %s1085
        %s1087 = sand.u32 %s437, 1
        %s1088 = scalar_lea.vmem [#allocation26], %s1087
        %p1089 = pneg %p450
        %p1090 = pneg %p447
        %s1091 = sand.u32 %s58, 1
        %s1092 = scalar_lea.sflag [#allocation28], %s1091
        %s1093 = sand.u32 %s463, 1
        %s1094 = scalar_lea.vmem [#allocation27], %s1093
        %p1095 = pneg %p476
        %p1096 = pneg %p473
        %s1097 = sand.u32 %s58, 1
        %s1098 = scalar_lea.sflag [#allocation28], %s1097
        %s1099 = sand.u32 %s489, 1
        %s1100 = scalar_lea.vmem [#allocation29], %s1099
        %p1101 = pneg %p502
        %p1102 = pneg %p499
        %p1103 = pneg %p528
        %p1104 = pneg %p525
        %s1105 = sand.u32 %s515, 1
        %s1106 = scalar_lea.sflag [#allocation5], %s1105
        %s1107 = sand.u32 %s515, 1
        %s1108 = smul.addr %s1107, 8
        %s1109 = scalar_lea.vmem [#allocation30], %s1108
        %p1111 = scmp.eq.s32.totalorder %s63, 0
        // Predicated region
        $region157: #{tpu_custom_call.1} parent=87 // pred_check
          %p1112 = pneg %p1111
        $region158: #{tpu_custom_call.1} parent=87 // pred_check_branch
          %1114 = sbr.rel (%p1112) target = $region160
        $region159: #{tpu_custom_call.1} parent=87 // pred_region
          %v1115 = vld [vmem:[%s872] sm:$0xff]
          %vm1116 = vcmask 261120
          %1117 = vst.msk [vmem:[%s1109] sm:$0xff] %vm1116, %v1115
        $region160: #{tpu_custom_call.1} parent=87 // pred_fallthru
          _
        %v1118 = vld [vmem:[%s863] sm:$0xff]
        %v1119 = vld [vmem:[%s1109] sm:$0xff]
        %v1120 = vpack.c.bf16 %v1118, %v1118
        %v1121 = vld [vmem:[%s885] sm:$0xf]
        %v1122 = vld [vmem:[%s885 + $0x4] sm:$0xf]
        %v1123 = vld [vmem:[%s885 + $0x8] sm:$0xf]
        %v1124 = vld [vmem:[%s885 + $0xc] sm:$0xf]
        %v1125 = vld [vmem:[%s893] sm:$0x1]
        %v1127 = vlaneseq
        %v1128 = vshrl.u32 %v1127, 7
        %v1129 = vsub.s32 0, %v1128
        %v1130 = vrot.slane %v1125, %v1129
        %v1136 = vunpack.c.l.b16 %v1121
        %v1137 = vunpack.c.l.b16 %v1122
        %v1138 = vunpack.c.l.b16 %v1123
        %v1139 = vunpack.c.l.b16 %v1124
        %v1140 = vpack.c.b16 %v1137, %v1136
        %v1141 = vpack.c.b16 %v1139, %v1138
        %vm1144 = vcmask 261120
        %v1146 = vsel %vm1144, %v1120, 0
        %1148 = vmatprep.subr.bf16.mxu0 0
        %1149 = vmatpush1.bf16.msra.mxu0 %v1140
        %1150 = vmatprep.subr.bf16.mxu0 0
        %1151 = vmatpush1.bf16.msra.mxu0 %v1141
        %1152 = vmatprep.subr.bf16.mxu0 0
        %1153 = vmatpush1.bf16.msra.mxu0 0
        %1154 = vmatprep.subr.bf16.mxu0 0
        %1155 = vmatpush1.bf16.msra.mxu0 0
        %1156 = vmatprep.subr.bf16.mxu0 0
        %1157 = vmatpush1.bf16.msra.mxu0 0
        %1158 = vmatprep.subr.bf16.mxu0 0
        %1159 = vmatpush1.bf16.msra.mxu0 0
        %1160 = vmatprep.subr.bf16.mxu0 0
        %1161 = vmatpush1.bf16.msra.mxu0 0
        %1162 = vmatprep.subr.bf16.mxu0 0
        %1163 = vmatpush1.bf16.msra.mxu0 0
        %1164 = vmatprep.subr.bf16.mxu0 0
        %1165 = vmatpush1.bf16.msra.mxu0 0
        %1166 = vmatprep.subr.bf16.mxu0 0
        %1167 = vmatpush1.bf16.msra.mxu0 0
        %1168 = vmatprep.subr.bf16.mxu0 0
        %1169 = vmatpush1.bf16.msra.mxu0 0
        %1170 = vmatprep.subr.bf16.mxu0 0
        %1171 = vmatpush1.bf16.msra.mxu0 0
        %1172 = vmatprep.subr.bf16.mxu0 0
        %1173 = vmatpush1.bf16.msra.mxu0 0
        %1174 = vmatprep.subr.bf16.mxu0 0
        %1175 = vmatpush1.bf16.msra.mxu0 0
        %1176 = vmatprep.subr.bf16.mxu0 0
        %1177 = vmatpush1.bf16.msra.mxu0 0
        %1178 = vmatprep.subr.bf16.mxu0 0
        %1179 = vmatpush1.bf16.msra.mxu0 0
        %1180 = vmatprep.mubr.bf16.mxu0 0
        %1181 = vmatmul.mubr.bf16.gmra.mrb[0].mxu0 %v1146
        %v1182 = vpop.f32.mrb[0].mxu0
        %v1183 = vadd.f32 %v1130, %v1182
        %v1184 = vpop.f32.mrb[0].mxu0
        %v1185 = vpop.f32.mrb[0].mxu0
        %v1186 = vpop.f32.mrb[0].mxu0
        %1187 = vdwg.mxu0
        %v1188 = vpack.c.bf16 %v1119, %v1119
        %v1189 = vld [vmem:[%s902] sm:$0xf]
        %v1190 = vld [vmem:[%s902 + $0x4] sm:$0xf]
        %v1191 = vld [vmem:[%s902 + $0x8] sm:$0xf]
        %v1192 = vld [vmem:[%s902 + $0xc] sm:$0xf]
        %v1193 = vld [vmem:[%s910] sm:$0x1]
        %v1195 = vlaneseq
        %v1196 = vshrl.u32 %v1195, 7
        %v1197 = vsub.s32 0, %v1196
        %v1198 = vrot.slane %v1193, %v1197
        %v1204 = vunpack.c.l.b16 %v1189
        %v1205 = vunpack.c.l.b16 %v1190
        %v1206 = vunpack.c.l.b16 %v1191
        %v1207 = vunpack.c.l.b16 %v1192
        %v1208 = vpack.c.b16 %v1205, %v1204
        %v1209 = vpack.c.b16 %v1207, %v1206
        %v1213 = vsel %vm1144, %v1188, 0
        %1215 = vmatprep.subr.bf16.mxu0 0
        %1216 = vmatpush1.bf16.msra.mxu0 %v1208
        %1217 = vmatprep.subr.bf16.mxu0 0
        %1218 = vmatpush1.bf16.msra.mxu0 %v1209
        %1219 = vmatprep.subr.bf16.mxu0 0
        %1220 = vmatpush1.bf16.msra.mxu0 0
        %1221 = vmatprep.subr.bf16.mxu0 0
        %1222 = vmatpush1.bf16.msra.mxu0 0
        %1223 = vmatprep.subr.bf16.mxu0 0
        %1224 = vmatpush1.bf16.msra.mxu0 0
        %1225 = vmatprep.subr.bf16.mxu0 0
        %1226 = vmatpush1.bf16.msra.mxu0 0
        %1227 = vmatprep.subr.bf16.mxu0 0
        %1228 = vmatpush1.bf16.msra.mxu0 0
        %1229 = vmatprep.subr.bf16.mxu0 0
        %1230 = vmatpush1.bf16.msra.mxu0 0
        %1231 = vmatprep.subr.bf16.mxu0 0
        %1232 = vmatpush1.bf16.msra.mxu0 0
        %1233 = vmatprep.subr.bf16.mxu0 0
        %1234 = vmatpush1.bf16.msra.mxu0 0
        %1235 = vmatprep.subr.bf16.mxu0 0
        %1236 = vmatpush1.bf16.msra.mxu0 0
        %1237 = vmatprep.subr.bf16.mxu0 0
        %1238 = vmatpush1.bf16.msra.mxu0 0
        %1239 = vmatprep.subr.bf16.mxu0 0
        %1240 = vmatpush1.bf16.msra.mxu0 0
        %1241 = vmatprep.subr.bf16.mxu0 0
        %1242 = vmatpush1.bf16.msra.mxu0 0
        %1243 = vmatprep.subr.bf16.mxu0 0
        %1244 = vmatpush1.bf16.msra.mxu0 0
        %1245 = vmatprep.subr.bf16.mxu0 0
        %1246 = vmatpush1.bf16.msra.mxu0 0
        %1247 = vmatprep.mubr.bf16.mxu0 0
        %1248 = vmatmul.mubr.bf16.gmra.mrb[0].mxu0 %v1213
        %v1249 = vpop.f32.mrb[0].mxu0
        %v1250 = vadd.f32 %v1198, %v1249
        %v1251 = vpop.f32.mrb[0].mxu0
        %v1252 = vpop.f32.mrb[0].mxu0
        %v1253 = vpop.f32.mrb[0].mxu0
        %1254 = vdwg.mxu0
        %v1255 = vpack.c.bf16 %v1183, %v1183
        %v1256 = vpack.c.bf16 %v1250, %v1250
        %v1257 = vld [vmem:[#allocation8] sm:$0xff]
        %vm1258 = vcmask 64512
        %v1260 = vsel %vm1258, %v1255, 0
        %v1263 = vsel %vm1258, %v1256, 0
        %1265 = vmatprep.subr.bf16.mxu0 0
        %1266 = vmatpush1.bf16.xpose.msra.mxu0 %v1263
        %1267 = vmatprep.subr.bf16.mxu0 0
        %1268 = vmatpush1.bf16.xpose.msra.mxu0 0
        %1269 = vmatprep.subr.bf16.mxu0 0
        %1270 = vmatpush1.bf16.xpose.msra.mxu0 0
        %1271 = vmatprep.subr.bf16.mxu0 0
        %1272 = vmatpush1.bf16.xpose.msra.mxu0 0
        %1273 = vmatprep.subr.bf16.mxu0 0
        %1274 = vmatpush1.bf16.xpose.msra.mxu0 0
        %1275 = vmatprep.subr.bf16.mxu0 0
        %1276 = vmatpush1.bf16.xpose.msra.mxu0 0
        %1277 = vmatprep.subr.bf16.mxu0 0
        %1278 = vmatpush1.bf16.xpose.msra.mxu0 0
        %1279 = vmatprep.subr.bf16.mxu0 0
        %1280 = vmatpush1.bf16.xpose.msra.mxu0 0
        %1281 = vmatprep.subr.bf16.mxu0 0
        %1282 = vmatpush1.bf16.xpose.msra.mxu0 0
        %1283 = vmatprep.subr.bf16.mxu0 0
        %1284 = vmatpush1.bf16.xpose.msra.mxu0 0
        %1285 = vmatprep.subr.bf16.mxu0 0
        %1286 = vmatpush1.bf16.xpose.msra.mxu0 0
        %1287 = vmatprep.subr.bf16.mxu0 0
        %1288 = vmatpush1.bf16.xpose.msra.mxu0 0
        %1289 = vmatprep.subr.bf16.mxu0 0
        %1290 = vmatpush1.bf16.xpose.msra.mxu0 0
        %1291 = vmatprep.subr.bf16.mxu0 0
        %1292 = vmatpush1.bf16.xpose.msra.mxu0 0
        %1293 = vmatprep.subr.bf16.mxu0 0
        %1294 = vmatpush1.bf16.xpose.msra.mxu0 0
        %1295 = vmatprep.subr.bf16.mxu0 0
        %1296 = vmatpush1.bf16.xpose.msra.mxu0 0
        %1297 = vmatprep.mubr.bf16.mxu0 0
        %1298 = vmatmul.mubr.bf16.gmra.mrb[0].mxu0 %v1260
        %v1299 = vpop.f32.mrb[0].mxu0
        %v1300 = vadd.f32 %v1257, %v1299
        %v1301 = vpop.f32.mrb[0].mxu0
        %v1302 = vpop.f32.mrb[0].mxu0
        %v1303 = vpop.f32.mrb[0].mxu0
        %1304 = vdwg.mxu0
        %v1305 = vsel %vm1258, %v1300, -inf
        %1306 = vmax.xlane.f32.xlu0 %v1305
        %v1307 = vpop.xlane.xlu0 %1306
        %v1308 = vsub.f32 %v1300, %v1307
        %v1309 = vmul.f32 %v1308, 1.442695
        %v1310 = vpow.pop %v1309
        %v1311 = vsel %vm1258, %v1310, 0.0
        %1312 = vadd.xlane.f32.xlu0 %v1311
        %v1313 = vpop.xlane.xlu0 %1312
        %v1314 = vrcp.pop %v1313
        %v1315 = vmul.f32 %v1310, %v1314
        %v1316 = vpack.c.bf16 %v1315, %v1315
        %1318 = vrot.lane.b32.xlu0 %v1256, 96
        %v1319 = vpop.permute.xlu0 %1318
        %v1321 = vsel %vm1258, %v1316, 0
        %vm1323 = vcmask 1043456
        %v1325 = vsel %vm1323, %v1319, 0
        %1327 = vmatprep.subr.bf16.mxu0 0
        %1328 = vmatpush1.bf16.msra.mxu0 %v1325
        %1329 = vmatprep.subr.bf16.mxu0 0
        %1330 = vmatpush1.bf16.msra.mxu0 0
        %1331 = vmatprep.subr.bf16.mxu0 0
        %1332 = vmatpush1.bf16.msra.mxu0 0
        %1333 = vmatprep.subr.bf16.mxu0 0
        %1334 = vmatpush1.bf16.msra.mxu0 0
        %1335 = vmatprep.subr.bf16.mxu0 0
        %1336 = vmatpush1.bf16.msra.mxu0 0
        %1337 = vmatprep.subr.bf16.mxu0 0
        %1338 = vmatpush1.bf16.msra.mxu0 0
        %1339 = vmatprep.subr.bf16.mxu0 0
        %1340 = vmatpush1.bf16.msra.mxu0 0
        %1341 = vmatprep.subr.bf16.mxu0 0
        %1342 = vmatpush1.bf16.msra.mxu0 0
        %1343 = vmatprep.subr.bf16.mxu0 0
        %1344 = vmatpush1.bf16.msra.mxu0 0
        %1345 = vmatprep.subr.bf16.mxu0 0
        %1346 = vmatpush1.bf16.msra.mxu0 0
        %1347 = vmatprep.subr.bf16.mxu0 0
        %1348 = vmatpush1.bf16.msra.mxu0 0
        %1349 = vmatprep.subr.bf16.mxu0 0
        %1350 = vmatpush1.bf16.msra.mxu0 0
        %1351 = vmatprep.subr.bf16.mxu0 0
        %1352 = vmatpush1.bf16.msra.mxu0 0
        %1353 = vmatprep.subr.bf16.mxu0 0
        %1354 = vmatpush1.bf16.msra.mxu0 0
        %1355 = vmatprep.subr.bf16.mxu0 0
        %1356 = vmatpush1.bf16.msra.mxu0 0
        %1357 = vmatprep.subr.bf16.mxu0 0
        %1358 = vmatpush1.bf16.msra.mxu0 0
        %1359 = vmatprep.mubr.bf16.mxu0 0
        %1360 = vmatmul.mubr.bf16.gmra.mrb[0].mxu0 %v1321
        %v1361 = vpop.f32.mrb[0].mxu0
        %v1362 = vadd.f32 0.0, %v1361
        %v1363 = vpop.f32.mrb[0].mxu0
        %v1364 = vpop.f32.mrb[0].mxu0
        %v1365 = vpop.f32.mrb[0].mxu0
        %1366 = vdwg.mxu0
        %1367 = vst.msk [vmem:[#allocation2] sm:$0xff] %vm1258, %v1362
        %1369 = vrot.lane.b32.xlu0 %v1255, 120
        %v1370 = vpop.permute.xlu0 %1369
        %1371 = vrot.lane.b32.xlu0 %v1256, 120
        %v1372 = vpop.permute.xlu0 %1371
        %v1374 = vsel %vm1258, %v1370, 0
        %v1377 = vsel %vm1258, %v1372, 0
        %1379 = vmatprep.subr.bf16.mxu0 0
        %1380 = vmatpush1.bf16.xpose.msra.mxu0 %v1377
        %1381 = vmatprep.subr.bf16.mxu0 0
        %1382 = vmatpush1.bf16.xpose.msra.mxu0 0
        %1383 = vmatprep.subr.bf16.mxu0 0
        %1384 = vmatpush1.bf16.xpose.msra.mxu0 0
        %1385 = vmatprep.subr.bf16.mxu0 0
        %1386 = vmatpush1.bf16.xpose.msra.mxu0 0
        %1387 = vmatprep.subr.bf16.mxu0 0
        %1388 = vmatpush1.bf16.xpose.msra.mxu0 0
        %1389 = vmatprep.subr.bf16.mxu0 0
        %1390 = vmatpush1.bf16.xpose.msra.mxu0 0
        %1391 = vmatprep.subr.bf16.mxu0 0
        %1392 = vmatpush1.bf16.xpose.msra.mxu0 0
        %1393 = vmatprep.subr.bf16.mxu0 0
        %1394 = vmatpush1.bf16.xpose.msra.mxu0 0
        %1395 = vmatprep.subr.bf16.mxu0 0
        %1396 = vmatpush1.bf16.xpose.msra.mxu0 0
        %1397 = vmatprep.subr.bf16.mxu0 0
        %1398 = vmatpush1.bf16.xpose.msra.mxu0 0
        %1399 = vmatprep.subr.bf16.mxu0 0
        %1400 = vmatpush1.bf16.xpose.msra.mxu0 0
        %1401 = vmatprep.subr.bf16.mxu0 0
        %1402 = vmatpush1.bf16.xpose.msra.mxu0 0
        %1403 = vmatprep.subr.bf16.mxu0 0
        %1404 = vmatpush1.bf16.xpose.msra.mxu0 0
        %1405 = vmatprep.subr.bf16.mxu0 0
        %1406 = vmatpush1.bf16.xpose.msra.mxu0 0
        %1407 = vmatprep.subr.bf16.mxu0 0
        %1408 = vmatpush1.bf16.xpose.msra.mxu0 0
        %1409 = vmatprep.subr.bf16.mxu0 0
        %1410 = vmatpush1.bf16.xpose.msra.mxu0 0
        %1411 = vmatprep.mubr.bf16.mxu0 0
        %1412 = vmatmul.mubr.bf16.gmra.mrb[0].mxu0 %v1374
        %v1413 = vpop.f32.mrb[0].mxu0
        %v1414 = vadd.f32 %v1257, %v1413
        %v1415 = vpop.f32.mrb[0].mxu0
        %v1416 = vpop.f32.mrb[0].mxu0
        %v1417 = vpop.f32.mrb[0].mxu0
        %1418 = vdwg.mxu0
        %v1419 = vsel %vm1258, %v1414, -inf
        %1420 = vmax.xlane.f32.xlu0 %v1419
        %v1421 = vpop.xlane.xlu0 %1420
        %v1422 = vsub.f32 %v1414, %v1421
        %v1423 = vmul.f32 %v1422, 1.442695
        %v1424 = vpow.pop %v1423
        %v1425 = vsel %vm1258, %v1424, 0.0
        %1426 = vadd.xlane.f32.xlu0 %v1425
        %v1427 = vpop.xlane.xlu0 %1426
        %v1428 = vrcp.pop %v1427
        %v1429 = vmul.f32 %v1424, %v1428
        %v1430 = vpack.c.bf16 %v1429, %v1429
        %1431 = vrot.lane.b32.xlu0 %v1256, 88
        %v1432 = vpop.permute.xlu0 %1431
        %v1434 = vsel %vm1258, %v1430, 0
        %v1437 = vsel %vm1323, %v1432, 0
        %1439 = vmatprep.subr.bf16.mxu0 0
        %1440 = vmatpush1.bf16.msra.mxu0 %v1437
        %1441 = vmatprep.subr.bf16.mxu0 0
        %1442 = vmatpush1.bf16.msra.mxu0 0
        %1443 = vmatprep.subr.bf16.mxu0 0
        %1444 = vmatpush1.bf16.msra.mxu0 0
        %1445 = vmatprep.subr.bf16.mxu0 0
        %1446 = vmatpush1.bf16.msra.mxu0 0
        %1447 = vmatprep.subr.bf16.mxu0 0
        %1448 = vmatpush1.bf16.msra.mxu0 0
        %1449 = vmatprep.subr.bf16.mxu0 0
        %1450 = vmatpush1.bf16.msra.mxu0 0
        %1451 = vmatprep.subr.bf16.mxu0 0
        %1452 = vmatpush1.bf16.msra.mxu0 0
        %1453 = vmatprep.subr.bf16.mxu0 0
        %1454 = vmatpush1.bf16.msra.mxu0 0
        %1455 = vmatprep.subr.bf16.mxu0 0
        %1456 = vmatpush1.bf16.msra.mxu0 0
        %1457 = vmatprep.subr.bf16.mxu0 0
        %1458 = vmatpush1.bf16.msra.mxu0 0
        %1459 = vmatprep.subr.bf16.mxu0 0
        %1460 = vmatpush1.bf16.msra.mxu0 0
        %1461 = vmatprep.subr.bf16.mxu0 0
        %1462 = vmatpush1.bf16.msra.mxu0 0
        %1463 = vmatprep.subr.bf16.mxu0 0
        %1464 = vmatpush1.bf16.msra.mxu0 0
        %1465 = vmatprep.subr.bf16.mxu0 0
        %1466 = vmatpush1.bf16.msra.mxu0 0
        %1467 = vmatprep.subr.bf16.mxu0 0
        %1468 = vmatpush1.bf16.msra.mxu0 0
        %1469 = vmatprep.subr.bf16.mxu0 0
        %1470 = vmatpush1.bf16.msra.mxu0 0
        %1471 = vmatprep.mubr.bf16.mxu0 0
        %1472 = vmatmul.mubr.bf16.gmra.mrb[0].mxu0 %v1434
        %v1473 = vpop.f32.mrb[0].mxu0
        %v1474 = vadd.f32 0.0, %v1473
        %v1475 = vpop.f32.mrb[0].mxu0
        %v1476 = vpop.f32.mrb[0].mxu0
        %v1477 = vpop.f32.mrb[0].mxu0
        %1478 = vdwg.mxu0
        %1480 = vrot.lane.b32.xlu0 %v1474, 8
        %v1481 = vpop.permute.xlu0 %1480
        %vm1483 = vcmask 130112
        %1484 = vst.msk [vmem:[#allocation2] sm:$0xff] %vm1483, %v1481
        %1485 = vrot.lane.b32.xlu0 %v1255, 112
        %v1486 = vpop.permute.xlu0 %1485
        %1487 = vrot.lane.b32.xlu0 %v1256, 112
        %v1488 = vpop.permute.xlu0 %1487
        %v1490 = vsel %vm1258, %v1486, 0
        %v1493 = vsel %vm1258, %v1488, 0
        %1495 = vmatprep.subr.bf16.mxu0 0
        %1496 = vmatpush1.bf16.xpose.msra.mxu0 %v1493
        %1497 = vmatprep.subr.bf16.mxu0 0
        %1498 = vmatpush1.bf16.xpose.msra.mxu0 0
        %1499 = vmatprep.subr.bf16.mxu0 0
        %1500 = vmatpush1.bf16.xpose.msra.mxu0 0
        %1501 = vmatprep.subr.bf16.mxu0 0
        %1502 = vmatpush1.bf16.xpose.msra.mxu0 0
        %1503 = vmatprep.subr.bf16.mxu0 0
        %1504 = vmatpush1.bf16.xpose.msra.mxu0 0
        %1505 = vmatprep.subr.bf16.mxu0 0
        %1506 = vmatpush1.bf16.xpose.msra.mxu0 0
        %1507 = vmatprep.subr.bf16.mxu0 0
        %1508 = vmatpush1.bf16.xpose.msra.mxu0 0
        %1509 = vmatprep.subr.bf16.mxu0 0
        %1510 = vmatpush1.bf16.xpose.msra.mxu0 0
        %1511 = vmatprep.subr.bf16.mxu0 0
        %1512 = vmatpush1.bf16.xpose.msra.mxu0 0
        %1513 = vmatprep.subr.bf16.mxu0 0
        %1514 = vmatpush1.bf16.xpose.msra.mxu0 0
        %1515 = vmatprep.subr.bf16.mxu0 0
        %1516 = vmatpush1.bf16.xpose.msra.mxu0 0
        %1517 = vmatprep.subr.bf16.mxu0 0
        %1518 = vmatpush1.bf16.xpose.msra.mxu0 0
        %1519 = vmatprep.subr.bf16.mxu0 0
        %1520 = vmatpush1.bf16.xpose.msra.mxu0 0
        %1521 = vmatprep.subr.bf16.mxu0 0
        %1522 = vmatpush1.bf16.xpose.msra.mxu0 0
        %1523 = vmatprep.subr.bf16.mxu0 0
        %1524 = vmatpush1.bf16.xpose.msra.mxu0 0
        %1525 = vmatprep.subr.bf16.mxu0 0
        %1526 = vmatpush1.bf16.xpose.msra.mxu0 0
        %1527 = vmatprep.mubr.bf16.mxu0 0
        %1528 = vmatmul.mubr.bf16.gmra.mrb[0].mxu0 %v1490
        %v1529 = vpop.f32.mrb[0].mxu0
        %v1530 = vadd.f32 %v1257, %v1529
        %v1531 = vpop.f32.mrb[0].mxu0
        %v1532 = vpop.f32.mrb[0].mxu0
        %v1533 = vpop.f32.mrb[0].mxu0
        %1534 = vdwg.mxu0
        %v1535 = vsel %vm1258, %v1530, -inf
        %1536 = vmax.xlane.f32.xlu0 %v1535
        %v1537 = vpop.xlane.xlu0 %1536
        %v1538 = vsub.f32 %v1530, %v1537
        %v1539 = vmul.f32 %v1538, 1.442695
        %v1540 = vpow.pop %v1539
        %v1541 = vsel %vm1258, %v1540, 0.0
        %1542 = vadd.xlane.f32.xlu0 %v1541
        %v1543 = vpop.xlane.xlu0 %1542
        %v1544 = vrcp.pop %v1543
        %v1545 = vmul.f32 %v1540, %v1544
        %v1546 = vpack.c.bf16 %v1545, %v1545
        %1547 = vrot.lane.b32.xlu0 %v1256, 80
        %v1548 = vpop.permute.xlu0 %1547
        %v1550 = vsel %vm1258, %v1546, 0
        %v1553 = vsel %vm1323, %v1548, 0
        %1555 = vmatprep.subr.bf16.mxu0 0
        %1556 = vmatpush1.bf16.msra.mxu0 %v1553
        %1557 = vmatprep.subr.bf16.mxu0 0
        %1558 = vmatpush1.bf16.msra.mxu0 0
        %1559 = vmatprep.subr.bf16.mxu0 0
        %1560 = vmatpush1.bf16.msra.mxu0 0
        %1561 = vmatprep.subr.bf16.mxu0 0
        %1562 = vmatpush1.bf16.msra.mxu0 0
        %1563 = vmatprep.subr.bf16.mxu0 0
        %1564 = vmatpush1.bf16.msra.mxu0 0
        %1565 = vmatprep.subr.bf16.mxu0 0
        %1566 = vmatpush1.bf16.msra.mxu0 0
        %1567 = vmatprep.subr.bf16.mxu0 0
        %1568 = vmatpush1.bf16.msra.mxu0 0
        %1569 = vmatprep.subr.bf16.mxu0 0
        %1570 = vmatpush1.bf16.msra.mxu0 0
        %1571 = vmatprep.subr.bf16.mxu0 0
        %1572 = vmatpush1.bf16.msra.mxu0 0
        %1573 = vmatprep.subr.bf16.mxu0 0
        %1574 = vmatpush1.bf16.msra.mxu0 0
        %1575 = vmatprep.subr.bf16.mxu0 0
        %1576 = vmatpush1.bf16.msra.mxu0 0
        %1577 = vmatprep.subr.bf16.mxu0 0
        %1578 = vmatpush1.bf16.msra.mxu0 0
        %1579 = vmatprep.subr.bf16.mxu0 0
        %1580 = vmatpush1.bf16.msra.mxu0 0
        %1581 = vmatprep.subr.bf16.mxu0 0
        %1582 = vmatpush1.bf16.msra.mxu0 0
        %1583 = vmatprep.subr.bf16.mxu0 0
        %1584 = vmatpush1.bf16.msra.mxu0 0
        %1585 = vmatprep.subr.bf16.mxu0 0
        %1586 = vmatpush1.bf16.msra.mxu0 0
        %1587 = vmatprep.mubr.bf16.mxu0 0
        %1588 = vmatmul.mubr.bf16.gmra.mrb[0].mxu0 %v1550
        %v1589 = vpop.f32.mrb[0].mxu0
        %v1590 = vadd.f32 0.0, %v1589
        %v1591 = vpop.f32.mrb[0].mxu0
        %v1592 = vpop.f32.mrb[0].mxu0
        %v1593 = vpop.f32.mrb[0].mxu0
        %1594 = vdwg.mxu0
        %1596 = vrot.lane.b32.xlu0 %v1590, 16
        %v1597 = vpop.permute.xlu0 %1596
        %vm1599 = vcmask 195712
        %1600 = vst.msk [vmem:[#allocation2] sm:$0xff] %vm1599, %v1597
        %1601 = vrot.lane.b32.xlu0 %v1255, 104
        %v1602 = vpop.permute.xlu0 %1601
        %1603 = vrot.lane.b32.xlu0 %v1256, 104
        %v1604 = vpop.permute.xlu0 %1603
        %v1606 = vsel %vm1258, %v1602, 0
        %v1609 = vsel %vm1258, %v1604, 0
        %1611 = vmatprep.subr.bf16.mxu0 0
        %1612 = vmatpush1.bf16.xpose.msra.mxu0 %v1609
        %1613 = vmatprep.subr.bf16.mxu0 0
        %1614 = vmatpush1.bf16.xpose.msra.mxu0 0
        %1615 = vmatprep.subr.bf16.mxu0 0
        %1616 = vmatpush1.bf16.xpose.msra.mxu0 0
        %1617 = vmatprep.subr.bf16.mxu0 0
        %1618 = vmatpush1.bf16.xpose.msra.mxu0 0
        %1619 = vmatprep.subr.bf16.mxu0 0
        %1620 = vmatpush1.bf16.xpose.msra.mxu0 0
        %1621 = vmatprep.subr.bf16.mxu0 0
        %1622 = vmatpush1.bf16.xpose.msra.mxu0 0
        %1623 = vmatprep.subr.bf16.mxu0 0
        %1624 = vmatpush1.bf16.xpose.msra.mxu0 0
        %1625 = vmatprep.subr.bf16.mxu0 0
        %1626 = vmatpush1.bf16.xpose.msra.mxu0 0
        %1627 = vmatprep.subr.bf16.mxu0 0
        %1628 = vmatpush1.bf16.xpose.msra.mxu0 0
        %1629 = vmatprep.subr.bf16.mxu0 0
        %1630 = vmatpush1.bf16.xpose.msra.mxu0 0
        %1631 = vmatprep.subr.bf16.mxu0 0
        %1632 = vmatpush1.bf16.xpose.msra.mxu0 0
        %1633 = vmatprep.subr.bf16.mxu0 0
        %1634 = vmatpush1.bf16.xpose.msra.mxu0 0
        %1635 = vmatprep.subr.bf16.mxu0 0
        %1636 = vmatpush1.bf16.xpose.msra.mxu0 0
        %1637 = vmatprep.subr.bf16.mxu0 0
        %1638 = vmatpush1.bf16.xpose.msra.mxu0 0
        %1639 = vmatprep.subr.bf16.mxu0 0
        %1640 = vmatpush1.bf16.xpose.msra.mxu0 0
        %1641 = vmatprep.subr.bf16.mxu0 0
        %1642 = vmatpush1.bf16.xpose.msra.mxu0 0
        %1643 = vmatprep.mubr.bf16.mxu0 0
        %1644 = vmatmul.mubr.bf16.gmra.mrb[0].mxu0 %v1606
        %v1645 = vpop.f32.mrb[0].mxu0
        %v1646 = vadd.f32 %v1257, %v1645
        %v1647 = vpop.f32.mrb[0].mxu0
        %v1648 = vpop.f32.mrb[0].mxu0
        %v1649 = vpop.f32.mrb[0].mxu0
        %1650 = vdwg.mxu0
        %v1651 = vsel %vm1258, %v1646, -inf
        %1652 = vmax.xlane.f32.xlu0 %v1651
        %v1653 = vpop.xlane.xlu0 %1652
        %v1654 = vsub.f32 %v1646, %v1653
        %v1655 = vmul.f32 %v1654, 1.442695
        %v1656 = vpow.pop %v1655
        %v1657 = vsel %vm1258, %v1656, 0.0
        %1658 = vadd.xlane.f32.xlu0 %v1657
        %v1659 = vpop.xlane.xlu0 %1658
        %v1660 = vrcp.pop %v1659
        %v1661 = vmul.f32 %v1656, %v1660
        %v1662 = vpack.c.bf16 %v1661, %v1661
        %1663 = vrot.lane.b32.xlu0 %v1256, 72
        %v1664 = vpop.permute.xlu0 %1663
        %v1666 = vsel %vm1258, %v1662, 0
        %v1669 = vsel %vm1323, %v1664, 0
        %1671 = vmatprep.subr.bf16.mxu0 0
        %1672 = vmatpush1.bf16.msra.mxu0 %v1669
        %1673 = vmatprep.subr.bf16.mxu0 0
        %1674 = vmatpush1.bf16.msra.mxu0 0
        %1675 = vmatprep.subr.bf16.mxu0 0
        %1676 = vmatpush1.bf16.msra.mxu0 0
        %1677 = vmatprep.subr.bf16.mxu0 0
        %1678 = vmatpush1.bf16.msra.mxu0 0
        %1679 = vmatprep.subr.bf16.mxu0 0
        %1680 = vmatpush1.bf16.msra.mxu0 0
        %1681 = vmatprep.subr.bf16.mxu0 0
        %1682 = vmatpush1.bf16.msra.mxu0 0
        %1683 = vmatprep.subr.bf16.mxu0 0
        %1684 = vmatpush1.bf16.msra.mxu0 0
        %1685 = vmatprep.subr.bf16.mxu0 0
        %1686 = vmatpush1.bf16.msra.mxu0 0
        %1687 = vmatprep.subr.bf16.mxu0 0
        %1688 = vmatpush1.bf16.msra.mxu0 0
        %1689 = vmatprep.subr.bf16.mxu0 0
        %1690 = vmatpush1.bf16.msra.mxu0 0
        %1691 = vmatprep.subr.bf16.mxu0 0
        %1692 = vmatpush1.bf16.msra.mxu0 0
        %1693 = vmatprep.subr.bf16.mxu0 0
        %1694 = vmatpush1.bf16.msra.mxu0 0
        %1695 = vmatprep.subr.bf16.mxu0 0
        %1696 = vmatpush1.bf16.msra.mxu0 0
        %1697 = vmatprep.subr.bf16.mxu0 0
        %1698 = vmatpush1.bf16.msra.mxu0 0
        %1699 = vmatprep.subr.bf16.mxu0 0
        %1700 = vmatpush1.bf16.msra.mxu0 0
        %1701 = vmatprep.subr.bf16.mxu0 0
        %1702 = vmatpush1.bf16.msra.mxu0 0
        %1703 = vmatprep.mubr.bf16.mxu0 0
        %1704 = vmatmul.mubr.bf16.gmra.mrb[0].mxu0 %v1666
        %v1705 = vpop.f32.mrb[0].mxu0
        %v1706 = vadd.f32 0.0, %v1705
        %v1707 = vpop.f32.mrb[0].mxu0
        %v1708 = vpop.f32.mrb[0].mxu0
        %v1709 = vpop.f32.mrb[0].mxu0
        %1710 = vdwg.mxu0
        %1712 = vrot.lane.b32.xlu0 %v1706, 24
        %v1713 = vpop.permute.xlu0 %1712
        %vm1715 = vcmask 261312
        %1716 = vst.msk [vmem:[#allocation2] sm:$0xff] %vm1715, %v1713
        %v1717 = vld [vmem:[#allocation2] sm:$0xff]
        %v1718 = vpack.c.bf16 %v1717, %v1717
        %v1719 = vld [vmem:[%s919] sm:$0xf]
        %v1720 = vld [vmem:[%s919 + $0x4] sm:$0xf]
        %v1721 = vld [vmem:[%s919 + $0x8] sm:$0xf]
        %v1722 = vld [vmem:[%s919 + $0xc] sm:$0xf]
        %v1723 = vld [vmem:[%s927] sm:$0x1]
        %v1725 = vlaneseq
        %v1726 = vshrl.u32 %v1725, 7
        %v1727 = vsub.s32 0, %v1726
        %v1728 = vrot.slane %v1723, %v1727
        %v1734 = vunpack.c.l.b16 %v1719
        %v1735 = vunpack.c.l.b16 %v1720
        %v1736 = vunpack.c.l.b16 %v1721
        %v1737 = vunpack.c.l.b16 %v1722
        %v1738 = vpack.c.b16 %v1735, %v1734
        %v1739 = vpack.c.b16 %v1737, %v1736
        %v1743 = vsel %vm1144, %v1718, 0
        %1745 = vmatprep.subr.bf16.mxu0 0
        %1746 = vmatpush1.bf16.msra.mxu0 %v1738
        %1747 = vmatprep.subr.bf16.mxu0 0
        %1748 = vmatpush1.bf16.msra.mxu0 %v1739
        %1749 = vmatprep.subr.bf16.mxu0 0
        %1750 = vmatpush1.bf16.msra.mxu0 0
        %1751 = vmatprep.subr.bf16.mxu0 0
        %1752 = vmatpush1.bf16.msra.mxu0 0
        %1753 = vmatprep.subr.bf16.mxu0 0
        %1754 = vmatpush1.bf16.msra.mxu0 0
        %1755 = vmatprep.subr.bf16.mxu0 0
        %1756 = vmatpush1.bf16.msra.mxu0 0
        %1757 = vmatprep.subr.bf16.mxu0 0
        %1758 = vmatpush1.bf16.msra.mxu0 0
        %1759 = vmatprep.subr.bf16.mxu0 0
        %1760 = vmatpush1.bf16.msra.mxu0 0
        %1761 = vmatprep.subr.bf16.mxu0 0
        %1762 = vmatpush1.bf16.msra.mxu0 0
        %1763 = vmatprep.subr.bf16.mxu0 0
        %1764 = vmatpush1.bf16.msra.mxu0 0
        %1765 = vmatprep.subr.bf16.mxu0 0
        %1766 = vmatpush1.bf16.msra.mxu0 0
        %1767 = vmatprep.subr.bf16.mxu0 0
        %1768 = vmatpush1.bf16.msra.mxu0 0
        %1769 = vmatprep.subr.bf16.mxu0 0
        %1770 = vmatpush1.bf16.msra.mxu0 0
        %1771 = vmatprep.subr.bf16.mxu0 0
        %1772 = vmatpush1.bf16.msra.mxu0 0
        %1773 = vmatprep.subr.bf16.mxu0 0
        %1774 = vmatpush1.bf16.msra.mxu0 0
        %1775 = vmatprep.subr.bf16.mxu0 0
        %1776 = vmatpush1.bf16.msra.mxu0 0
        %1777 = vmatprep.mubr.bf16.mxu0 0
        %1778 = vmatmul.mubr.bf16.gmra.mrb[0].mxu0 %v1743
        %v1779 = vpop.f32.mrb[0].mxu0
        %v1780 = vadd.f32 %v1728, %v1779
        %v1781 = vpop.f32.mrb[0].mxu0
        %v1782 = vpop.f32.mrb[0].mxu0
        %v1783 = vpop.f32.mrb[0].mxu0
        %1784 = vdwg.mxu0
        %v1785 = vadd.f32 %v1118, %v1780
        %v1786 = vld [vmem:[%s935] sm:$0x1]
        %v1787 = vld [vmem:[%s943] sm:$0x1]
        %v1788 = vsel %vm1144, %v1785, 0.0
        %1789 = vadd.xlane.f32.xlu0 %v1788
        %v1790 = vpop.xlane.xlu0 %1789
        %v1791 = vrcp.pop 32.0
        %v1792 = vmul.f32 %v1790, %v1791
        %v1793 = vsub.f32 %v1785, %v1792
        %v1794 = vmul.f32 %v1793, %v1793
        %v1795 = vsel %vm1144, %v1794, 0.0
        %1796 = vadd.xlane.f32.xlu0 %v1795
        %v1797 = vpop.xlane.xlu0 %1796
        %v1798 = vmul.f32 %v1797, %v1791
        %v1799 = vadd.f32 %v1798, 1e-05
        %v1800 = vrsqrt.pop %v1799
        %v1801 = vmul.f32 %v1793, %v1800
        %v1803 = vlaneseq
        %v1804 = vshrl.u32 %v1803, 7
        %v1805 = vsub.s32 0, %v1804
        %v1806 = vrot.slane %v1786, %v1805
        %v1808 = vmul.f32 %v1801, %v1806
        %v1810 = vlaneseq
        %v1811 = vshrl.u32 %v1810, 7
        %v1812 = vsub.s32 0, %v1811
        %v1813 = vrot.slane %v1787, %v1812
        %v1815 = vadd.f32 %v1808, %v1813
        %v1816 = vpack.c.bf16 %v1815, %v1815
        %v1817 = vld [vmem:[%s952] sm:$0xf]
        %v1818 = vld [vmem:[%s952 + $0x4] sm:$0xf]
        %v1819 = vld [vmem:[%s952 + $0x8] sm:$0xf]
        %v1820 = vld [vmem:[%s952 + $0xc] sm:$0xf]
        %v1821 = vld [vmem:[%s960] sm:$0x1]
        %v1823 = vlaneseq
        %v1824 = vshrl.u32 %v1823, 7
        %v1825 = vsub.s32 0, %v1824
        %v1826 = vrot.slane %v1821, %v1825
        %v1832 = vunpack.c.l.b16 %v1817
        %v1833 = vunpack.c.l.b16 %v1818
        %v1834 = vunpack.c.l.b16 %v1819
        %v1835 = vunpack.c.l.b16 %v1820
        %v1836 = vpack.c.b16 %v1833, %v1832
        %v1837 = vpack.c.b16 %v1835, %v1834
        %v1841 = vsel %vm1144, %v1816, 0
        %1843 = vmatprep.subr.bf16.mxu0 0
        %1844 = vmatpush1.bf16.msra.mxu0 %v1836
        %1845 = vmatprep.subr.bf16.mxu0 0
        %1846 = vmatpush1.bf16.msra.mxu0 %v1837
        %1847 = vmatprep.subr.bf16.mxu0 0
        %1848 = vmatpush1.bf16.msra.mxu0 0
        %1849 = vmatprep.subr.bf16.mxu0 0
        %1850 = vmatpush1.bf16.msra.mxu0 0
        %1851 = vmatprep.subr.bf16.mxu0 0
        %1852 = vmatpush1.bf16.msra.mxu0 0
        %1853 = vmatprep.subr.bf16.mxu0 0
        %1854 = vmatpush1.bf16.msra.mxu0 0
        %1855 = vmatprep.subr.bf16.mxu0 0
        %1856 = vmatpush1.bf16.msra.mxu0 0
        %1857 = vmatprep.subr.bf16.mxu0 0
        %1858 = vmatpush1.bf16.msra.mxu0 0
        %1859 = vmatprep.subr.bf16.mxu0 0
        %1860 = vmatpush1.bf16.msra.mxu0 0
        %1861 = vmatprep.subr.bf16.mxu0 0
        %1862 = vmatpush1.bf16.msra.mxu0 0
        %1863 = vmatprep.subr.bf16.mxu0 0
        %1864 = vmatpush1.bf16.msra.mxu0 0
        %1865 = vmatprep.subr.bf16.mxu0 0
        %1866 = vmatpush1.bf16.msra.mxu0 0
        %1867 = vmatprep.subr.bf16.mxu0 0
        %1868 = vmatpush1.bf16.msra.mxu0 0
        %1869 = vmatprep.subr.bf16.mxu0 0
        %1870 = vmatpush1.bf16.msra.mxu0 0
        %1871 = vmatprep.subr.bf16.mxu0 0
        %1872 = vmatpush1.bf16.msra.mxu0 0
        %1873 = vmatprep.subr.bf16.mxu0 0
        %1874 = vmatpush1.bf16.msra.mxu0 0
        %1875 = vmatprep.mubr.bf16.mxu0 0
        %1876 = vmatmul.mubr.bf16.gmra.mrb[0].mxu0 %v1841
        %v1877 = vpop.f32.mrb[0].mxu0
        %v1878 = vadd.f32 %v1826, %v1877
        %v1879 = vpop.f32.mrb[0].mxu0
        %v1880 = vpop.f32.mrb[0].mxu0
        %v1881 = vpop.f32.mrb[0].mxu0
        %1882 = vdwg.mxu0
        %v1883 = vmax.f32 %v1878, 0.0
        %v1884 = vpack.c.bf16 %v1883, %v1883
        %v1885 = vld [vmem:[%s969] sm:$0xf]
        %v1886 = vld [vmem:[%s969 + $0x4] sm:$0xf]
        %v1887 = vld [vmem:[%s969 + $0x8] sm:$0xf]
        %v1888 = vld [vmem:[%s969 + $0xc] sm:$0xf]
        %v1889 = vld [vmem:[%s977] sm:$0x1]
        %v1891 = vlaneseq
        %v1892 = vshrl.u32 %v1891, 7
        %v1893 = vsub.s32 0, %v1892
        %v1894 = vrot.slane %v1889, %v1893
        %v1900 = vunpack.c.l.b16 %v1885
        %v1901 = vunpack.c.l.b16 %v1886
        %v1902 = vunpack.c.l.b16 %v1887
        %v1903 = vunpack.c.l.b16 %v1888
        %v1904 = vpack.c.b16 %v1901, %v1900
        %v1905 = vpack.c.b16 %v1903, %v1902
        %v1909 = vsel %vm1144, %v1884, 0
        %1911 = vmatprep.subr.bf16.mxu0 0
        %1912 = vmatpush1.bf16.msra.mxu0 %v1904
        %1913 = vmatprep.subr.bf16.mxu0 0
        %1914 = vmatpush1.bf16.msra.mxu0 %v1905
        %1915 = vmatprep.subr.bf16.mxu0 0
        %1916 = vmatpush1.bf16.msra.mxu0 0
        %1917 = vmatprep.subr.bf16.mxu0 0
        %1918 = vmatpush1.bf16.msra.mxu0 0
        %1919 = vmatprep.subr.bf16.mxu0 0
        %1920 = vmatpush1.bf16.msra.mxu0 0
        %1921 = vmatprep.subr.bf16.mxu0 0
        %1922 = vmatpush1.bf16.msra.mxu0 0
        %1923 = vmatprep.subr.bf16.mxu0 0
        %1924 = vmatpush1.bf16.msra.mxu0 0
        %1925 = vmatprep.subr.bf16.mxu0 0
        %1926 = vmatpush1.bf16.msra.mxu0 0
        %1927 = vmatprep.subr.bf16.mxu0 0
        %1928 = vmatpush1.bf16.msra.mxu0 0
        %1929 = vmatprep.subr.bf16.mxu0 0
        %1930 = vmatpush1.bf16.msra.mxu0 0
        %1931 = vmatprep.subr.bf16.mxu0 0
        %1932 = vmatpush1.bf16.msra.mxu0 0
        %1933 = vmatprep.subr.bf16.mxu0 0
        %1934 = vmatpush1.bf16.msra.mxu0 0
        %1935 = vmatprep.subr.bf16.mxu0 0
        %1936 = vmatpush1.bf16.msra.mxu0 0
        %1937 = vmatprep.subr.bf16.mxu0 0
        %1938 = vmatpush1.bf16.msra.mxu0 0
        %1939 = vmatprep.subr.bf16.mxu0 0
        %1940 = vmatpush1.bf16.msra.mxu0 0
        %1941 = vmatprep.subr.bf16.mxu0 0
        %1942 = vmatpush1.bf16.msra.mxu0 0
        %1943 = vmatprep.mubr.bf16.mxu0 0
        %1944 = vmatmul.mubr.bf16.gmra.mrb[0].mxu0 %v1909
        %v1945 = vpop.f32.mrb[0].mxu0
        %v1946 = vadd.f32 %v1894, %v1945
        %v1947 = vpop.f32.mrb[0].mxu0
        %v1948 = vpop.f32.mrb[0].mxu0
        %v1949 = vpop.f32.mrb[0].mxu0
        %1950 = vdwg.mxu0
        %v1951 = vadd.f32 %v1815, %v1946
        %v1952 = vld [vmem:[%s985] sm:$0x1]
        %v1953 = vld [vmem:[%s993] sm:$0x1]
        %v1954 = vsel %vm1144, %v1951, 0.0
        %1955 = vadd.xlane.f32.xlu0 %v1954
        %v1956 = vpop.xlane.xlu0 %1955
        %v1957 = vmul.f32 %v1956, %v1791
        %v1958 = vsub.f32 %v1951, %v1957
        %v1959 = vmul.f32 %v1958, %v1958
        %v1960 = vsel %vm1144, %v1959, 0.0
        %1961 = vadd.xlane.f32.xlu0 %v1960
        %v1962 = vpop.xlane.xlu0 %1961
        %v1963 = vmul.f32 %v1962, %v1791
        %v1964 = vadd.f32 %v1963, 1e-05
        %v1965 = vrsqrt.pop %v1964
        %v1966 = vmul.f32 %v1958, %v1965
        %v1968 = vlaneseq
        %v1969 = vshrl.u32 %v1968, 7
        %v1970 = vsub.s32 0, %v1969
        %v1971 = vrot.slane %v1952, %v1970
        %v1973 = vmul.f32 %v1966, %v1971
        %v1975 = vlaneseq
        %v1976 = vshrl.u32 %v1975, 7
        %v1977 = vsub.s32 0, %v1976
        %v1978 = vrot.slane %v1953, %v1977
        %v1980 = vadd.f32 %v1973, %v1978
        %1981 = vst.msk [vmem:[%s1109] sm:$0xff] %vm1144, %v1980
        %s1982 = sand.u32 %s515, 1
        %s1983 = scalar_lea.sflag [#allocation5], %s1982
        %s1984 = sand.u32 %s515, 1
        %s1985 = smul.addr %s1984, 8
        %s1986 = scalar_lea.vmem [#allocation30], %s1985
        // Predicated region
        $region161: #{tpu_custom_call.1} parent=87 // pred_check
          %p1987 = pneg %p525
        $region162: #{tpu_custom_call.1} parent=87 // pred_check_branch
          %1989 = sbr.rel (%p1987) target = $region164
        $region163: #{tpu_custom_call.1} parent=87 // pred_region
          %s1991 = ssub.s32 128, 128
          %1992 = vsyncadd %s1983, %s1991
          %s1993 = smul.addr %s62, 128
          %s1994 = scalar_lea.hbm %s17, %s1993
          %s1996 = sshll.u32 %s1986, 4
          %s1997 = int_to_ptr.vmem [resolvable:$true] %s1996
          %1999 = dma.vmem_to_hbm [thread:$0]  %s1997, 128, %s1994, %s1983
        $region164: #{tpu_custom_call.1} parent=87 // pred_fallthru
          _
      $region88: #{tpu_custom_call.1} parent=5 // pred_fallthru
        _
      %p2000 = scmp.le.s32.totalorder 2, %s53
      // Predicated region
      $region165: #{tpu_custom_call.1} parent=5 // pred_check
        %p2001 = pneg %p2000
      $region166: #{tpu_custom_call.1} parent=5 // pred_check_branch
        %2003 = sbr.rel (%p2001) target = $region168
      $region167: #{tpu_custom_call.1} parent=5 // pred_region
        %s2004 = ssub.s32 %s53, 2
        // Predicated region
        $region169: #{tpu_custom_call.1} parent=167 // pred_check
          %p2005 = pneg %p531
        $region170: #{tpu_custom_call.1} parent=167 // pred_check_branch
          %2007 = sbr.rel (%p2005) target = $region172
        $region171: #{tpu_custom_call.1} parent=167 // pred_region
          %s2008 = sand.u32 %s516, 1
          %s2009 = scalar_lea.sflag [#allocation5], %s2008
          %s2010 = sand.u32 %s516, 1
          %s2011 = smul.addr %s2010, 8
          %s2012 = scalar_lea.vmem [#allocation30], %s2011
          %2013 = dma.done %s2009, 128
        $region172: #{tpu_custom_call.1} parent=167 // pred_fallthru
          _
      $region168: #{tpu_custom_call.1} parent=5 // pred_fallthru
        _
    $region6: #{tpu_custom_call.1} parent=1 // loop_footer
      %s57 = sadd.s32 1, %s53
    $region7: #{tpu_custom_call.1} parent=1 // loop_footer_branch
      %52 = sbr.rel target = $region3
    $region8: #{tpu_custom_call.1} parent=1 // loop_exit
      _
    %2014 = vsyncpa [#allocation4], 1
    %s2015 = scalar_lea.sflag [#allocation4], 1
    %2016 = vsyncpa %s2015, 1
    %2017 = vsyncpa [#allocation7], 1
    %s2018 = scalar_lea.sflag [#allocation7], 1
    %2019 = vsyncpa %s2018, 1
    %2020 = vsyncpa [#allocation10], 1
    %s2021 = scalar_lea.sflag [#allocation10], 1
    %2022 = vsyncpa %s2021, 1
    %2023 = vsyncpa [#allocation13], 1
    %s2024 = scalar_lea.sflag [#allocation13], 1
    %2025 = vsyncpa %s2024, 1
    %2026 = vsyncpa [#allocation16], 1
    %s2027 = scalar_lea.sflag [#allocation16], 1
    %2028 = vsyncpa %s2027, 1
    %2029 = vsyncpa [#allocation19], 1
    %s2030 = scalar_lea.sflag [#allocation19], 1
    %2031 = vsyncpa %s2030, 1
    %2032 = vsyncpa [#allocation22], 1
    %s2033 = scalar_lea.sflag [#allocation22], 1
    %2034 = vsyncpa %s2033, 1
    %2035 = vsyncpa [#allocation25], 1
    %s2036 = scalar_lea.sflag [#allocation25], 1
    %2037 = vsyncpa %s2036, 1
    %2038 = vsyncpa [#allocation28], 1
    %s2039 = scalar_lea.sflag [#allocation28], 1
    %2040 = vsyncpa %s2039, 1
    %2041 = vsyncpa [#allocation5], 1
    %s2042 = scalar_lea.sflag [#allocation5], 1
    %2043 = vsyncpa %s2042, 1

</llo_original>
